<compile_context>
chip_gen: v5e
topology: v5e:2x2
jax: 0.10.0
libtpu: 0.0.40
codegen_flags: <defaults>
</compile_context>

<pallas_src>
import jax
import jax.numpy as jnp
from jax.experimental import pallas as pl
from jax.experimental.pallas import tpu as pltpu

LN_EPS = 1e-5
REVIN_EPS = 1e-5


def _mm(a, b):
    return jnp.dot(a, b, preferred_element_type=jnp.float32)


# ----------------------------------------------------------------------------
# One-time weight packing: fold all flatten/concat/rearrange into the weights
# ----------------------------------------------------------------------------
def _block_diag(w, reps):
    """(fin, fout) -> (reps*fin, reps*fout), block-diagonal replication."""
    return jnp.kron(jnp.eye(reps, dtype=w.dtype), w)


def _tile_cols(v, reps):
    """(1, k) -> (1, reps*k), whole-row repetition (column index = r*k + j)."""
    return jnp.tile(v, (1, reps))


def _seg_mats(n_seg, seg):
    """Segment-mean reduction (n_seg*seg, n_seg) and expansion (n_seg, n_seg*seg)."""
    red = jnp.kron(jnp.eye(n_seg, dtype=jnp.float32),
                   jnp.ones((seg, 1), jnp.float32) / seg)
    exp = jnp.kron(jnp.eye(n_seg, dtype=jnp.float32),
                   jnp.ones((1, seg), jnp.float32))
    return red, exp


def pack_fused_params(params, cfg):
    """Transform natural TiDE parameters into the flat operand list of the
    fused kernel.  Done once, outside the kernel (free relative to runtime)."""
    L, H, N = cfg["label_len"], cfg["pred_len"], cfg["n_features"]
    T, _ = cfg["dyn_cov_shape"]
    feat, dod = cfg["feat_size"], cfg["decoder_output_dim"]
    use_ln, use_revin = cfg["layer_norm"], cfg["revin"]

    args = []

    # --- feature projection: block-diagonal over the T covariate time steps ---
    w1, b1, w2, b2, ws, bs, g, be = params["featproj"]
    fp_sc = ws is not None
    args += [_block_diag(w1, T), _tile_cols(b1, T),
             _block_diag(w2, T), _tile_cols(b2, T)]
    if fp_sc:
        args += [_block_diag(ws, T), _tile_cols(bs, T)]
    fp_S, fp_E = _seg_mats(T, feat)
    args += [_tile_cols(g, T), _tile_cols(be, T), fp_S, fp_E]

    # --- RevIN helpers (per-feature stats over the lookback window) ---
    if use_revin:
        eye_n = jnp.eye(N, dtype=jnp.float32)
        rv_S = jnp.tile(eye_n, (L, 1)) / L          # (L*N, N)  mean over l
        rv_EL = jnp.tile(eye_n, (1, L))             # (N, L*N)  expand to lookback
        rv_EH = jnp.tile(eye_n, (1, H))             # (N, H*N)  expand to horizon
        rw, rb = params["revin_w"], params["revin_b"]        # (1, N)
        args += [rv_S, rv_EL, rv_EH,
                 _tile_cols(rw, L), _tile_cols(rb, L),
                 _tile_cols(rw, H), _tile_cols(rb, H)]

    # --- encoder block 1: concat(proj, attr, lookback) folded into row splits ---
    w1, b1, w2, b2, ws, bs, g, be = params["encoder"][0]
    e1_sc = ws is not None
    s0 = T * feat
    s1 = s0 + cfg["attr_shape"][0] * cfg["attr_shape"][1]
    args += [w1[:s0], w1[s0:s1], w1[s1:], b1, w2, b2]
    if e1_sc:
        args += [ws[:s0], ws[s0:s1], ws[s1:], bs]
    args += [g, be]

    # --- remaining encoder blocks + dense decoder blocks (plain resblocks) ---
    mid_sc = []
    for p in list(params["encoder"][1:]) + list(params["decoder"]):
        w1, b1, w2, b2, ws, bs, g, be = p
        sc = ws is not None
        mid_sc.append(sc)
        args += [w1, b1, w2, b2]
        if sc:
            args += [ws, bs]
        args += [g, be]

    # --- temporal decoder: block-diag over H horizon steps; the per-step
    #     cat(dense, proj_feature) is folded into split weights ---------------
    w1, b1, w2, b2, ws, bs, g, be = params["temporal"]
    td_sc = ws is not None
    args += [_block_diag(w1[:dod], H), _block_diag(w1[dod:], H), _tile_cols(b1, H),
             _block_diag(w2, H), _tile_cols(b2, H)]
    if td_sc:
        args += [_block_diag(ws[:dod], H), _block_diag(ws[dod:], H),
                 _tile_cols(bs, H)]
    td_S, td_E = _seg_mats(H, N)
    args += [_tile_cols(g, H), _tile_cols(be, H), td_S, td_E]

    # --- lookback linear with the 'b l n -> (b n) l' rearrange folded in -----
    args += [jnp.kron(params["lin_w"], jnp.eye(N, dtype=jnp.float32)),
             jnp.repeat(params["lin_b"], N, axis=1)]

    meta = dict(L=L, H=H, N=N, T=T, feat=feat, dod=dod,
                use_ln=use_ln, use_revin=use_revin,
                fp_sc=fp_sc, e1_sc=e1_sc, mid_sc=tuple(mid_sc), td_sc=td_sc)
    return args, meta


# ----------------------------------------------------------------------------
# Fused Pallas kernel
# ----------------------------------------------------------------------------
def _make_fused_kernel(meta):
    L, H, N, T = meta["L"], meta["H"], meta["N"], meta["T"]
    feat, dod = meta["feat"], meta["dod"]
    use_ln, use_revin = meta["use_ln"], meta["use_revin"]
    fp_sc, e1_sc = meta["fp_sc"], meta["e1_sc"]
    mid_sc, td_sc = meta["mid_sc"], meta["td_sc"]

    def _ln_full(x, g, be):
        mu = jnp.mean(x, axis=-1, keepdims=True)
        c = x - mu
        var = jnp.mean(c * c, axis=-1, keepdims=True)
        return c * jax.lax.rsqrt(var + LN_EPS) * g + be

    def _ln_seg(x, red, exp, g, be):
        mu = _mm(x, red)
        c = x - _mm(mu, exp)
        var = _mm(c * c, red)
        return c * _mm(jax.lax.rsqrt(var + LN_EPS), exp) * g + be

    def kernel(*refs):
        *in_refs, o_ref = refs
        it = iter(in_refs)
        nxt = lambda: next(it)[...]  # noqa: E731

        xm, attr, yfl = nxt(), nxt(), nxt()

        # ---- feature projection (all (b, t) rows at once, block-diag weights)
        w1, b1, w2, b2 = nxt(), nxt(), nxt(), nxt()
        ws, bs = (nxt(), nxt()) if fp_sc else (None, None)
        g, be, red, exp = nxt(), nxt(), nxt(), nxt()
        hdn = jnp.maximum(_mm(xm, w1) + b1, 0.0)
        proj = _mm(hdn, w2) + b2
        proj = proj + (_mm(xm, ws) + bs if fp_sc else xm)
        # TODO(synk): dropout omitted (identity in inference mode).
        if use_ln:
            proj = _ln_seg(proj, red, exp, g, be)          # (B, T*feat)

        # ---- RevIN 'norm' over the lookback window
        yl = yfl[:, : L * N]                               # (B, L*N)
        if use_revin:
            rv_S, rv_EL, rv_EH = nxt(), nxt(), nxt()
            rwL, rbL, rwH, rbH = nxt(), nxt(), nxt(), nxt()
            mean_bn = _mm(yl, rv_S)                        # (B, N)
            cen = yl - _mm(mean_bn, rv_EL)
            var_bn = _mm(cen * cen, rv_S)                  # (B, N)
            yn = cen * _mm(jax.lax.rsqrt(var_bn + REVIN_EPS), rv_EL) * rwL + rbL
        else:
            yn = yl

        # ---- encoder block 1 (concat folded into split fc1 / shortcut weights)
        w1p, w1a, w1y, b1, w2, b2 = nxt(), nxt(), nxt(), nxt(), nxt(), nxt()
        if e1_sc:
            wsp, wsa, wsy, bs = nxt(), nxt(), nxt(), nxt()
        g, be = nxt(), nxt()
        hdn = jnp.maximum(_mm(proj, w1p) + _mm(attr, w1a) + _mm(yn, w1y) + b1, 0.0)
        x = _mm(hdn, w2) + b2
        if e1_sc:
            x = x + _mm(proj, wsp) + _mm(attr, wsa) + _mm(yn, wsy) + bs
        else:
            x = x + jnp.concatenate([proj, attr, yn], axis=1)
        if use_ln:
            x = _ln_full(x, g, be)

        # ---- remaining encoder blocks + dense decoder blocks
        for sc in mid_sc:
            w1, b1, w2, b2 = nxt(), nxt(), nxt(), nxt()
            ws, bs = (nxt(), nxt()) if sc else (None, None)
            g, be = nxt(), nxt()
            hdn = jnp.maximum(_mm(x, w1) + b1, 0.0)
            y = _mm(hdn, w2) + b2
            y = y + (_mm(x, ws) + bs if sc else x)
            x = _ln_full(y, g, be) if use_ln else y        # ends as (B, dod*H)

        # ---- temporal decoder (per-horizon-step resblock, block-diag weights)
        dense = x                                          # (B, H*dod)
        pf = proj[:, (T - H) * feat:]                      # (B, H*feat)
        w1d, w1pf, b1, w2, b2 = nxt(), nxt(), nxt(), nxt(), nxt()
        if td_sc:
            wsd, wspf, bs = nxt(), nxt(), nxt()
        g, be, red, exp = nxt(), nxt(), nxt(), nxt()
        hdn = jnp.maximum(_mm(dense, w1d) + _mm(pf, w1pf) + b1, 0.0)
        td = _mm(hdn, w2) + b2
        if td_sc:
            td = td + _mm(dense, wsd) + _mm(pf, wspf) + bs
        else:
            pieces = []
            for hh in range(H):
                pieces += [dense[:, hh * dod:(hh + 1) * dod],
                           pf[:, hh * feat:(hh + 1) * feat]]
            td = td + jnp.concatenate(pieces, axis=1)
        if use_ln:
            td = _ln_seg(td, red, exp, g, be)              # (B, H*N)

        # ---- lookback linear residual (rearranges folded into Kronecker weight)
        lb_w, lb_b = nxt(), nxt()
        pred = td + _mm(yn, lb_w) + lb_b                   # (B, H*N)

        # ---- RevIN 'denorm'
        if use_revin:
            inv_w = pl.reciprocal(rwH + REVIN_EPS * REVIN_EPS, approx=True)
            pred = (pred - rbH) * inv_w
            std_bn = jnp.sqrt(var_bn + REVIN_EPS)
            pred = pred * _mm(std_bn, rv_EH) + _mm(mean_bn, rv_EH)

        o_ref[...] = pred

    return kernel


# ----------------------------------------------------------------------------
# Forward
# ----------------------------------------------------------------------------
def tide_forward(params, batch_x, batch_y, batch_x_mark, batch_y_mark, cfg):
    del batch_x_mark  # unused by TiDEModel.forward
    B, H, N = cfg["batch_size"], cfg["pred_len"], cfg["n_features"]

    fused_args, meta = pack_fused_params(params, cfg)

    data = [
        batch_y_mark.reshape(B, -1).astype(jnp.float32),   # (B, T*Cdyn)
        batch_x.reshape(B, -1).astype(jnp.float32),        # (B, A0*A1)
        batch_y.reshape(B, -1).astype(jnp.float32),        # (B, (L+H)*N)
    ]
    args = data + fused_args

    kernel = _make_fused_kernel(meta)
    pred_flat = pl.pallas_call(
        kernel,
        out_shape=jax.ShapeDtypeStruct((B, H * N), jnp.float32),
        in_specs=[pl.BlockSpec(memory_space=pltpu.MemorySpace.VMEM)
                  for _ in args],
        out_specs=pl.BlockSpec(memory_space=pltpu.MemorySpace.VMEM),
    )(*args)

    pred = pred_flat.reshape(B, H, N)      # contiguous reshape (free)
    ans = batch_y[:, -H:, :]
    return pred, ans


# ----------------------------------------------------------------------------
# Parameter initialization (deterministic, synthetic)
# ----------------------------------------------------------------------------
def init_linear_params(key, fin, fout):
    kw, kb = jax.random.split(key)
    bound = 1.0 / (fin ** 0.5)
    w = jax.random.uniform(kw, (fin, fout), jnp.float32, -bound, bound)
    b = jax.random.uniform(kb, (1, fout), jnp.float32, -bound, bound)
    return w, b


def init_resblock_params(key, fin, fhid, fout):
    k1, k2, k3 = jax.random.split(key, 3)
    w1, b1 = init_linear_params(k1, fin, fhid)
    w2, b2 = init_linear_params(k2, fhid, fout)
    if fin != fout:
        ws, bs = init_linear_params(k3, fin, fout)
    else:
        ws, bs = None, None
    g = jnp.ones((1, fout), jnp.float32)
    be = jnp.zeros((1, fout), jnp.float32)
    return (w1, b1, w2, b2, ws, bs, g, be)


# ----------------------------------------------------------------------------
# Pure-JAX reference (for verification)
# ----------------------------------------------------------------------------
def _resblock_ref(x, p, layer_norm):
    w1, b1, w2, b2, ws, bs, g, be = p
    h = jnp.maximum(x @ w1 + b1, 0.0)
    out = h @ w2 + b2
    out = out + (x if ws is None else x @ ws + bs)
    if layer_norm:
        mu = out.mean(-1, keepdims=True)
        var = ((out - mu) ** 2).mean(-1, keepdims=True)
        out = (out - mu) / jnp.sqrt(var + LN_EPS) * g + be
    return out


def ref_forward(params, batch_x, batch_y, batch_x_mark, batch_y_mark, cfg):
    del batch_x_mark
    B, L, H = cfg["batch_size"], cfg["label_len"], cfg["pred_len"]
    N, feat, dod = cfg["n_features"], cfg["feat_size"], cfg["decoder_output_dim"]
    ln = cfg["layer_norm"]

    T = batch_y_mark.shape[1]
    proj_feature = _resblock_ref(batch_y_mark.reshape(B * T, -1),
                                 params["featproj"], ln).reshape(B, T, feat)

    yl = batch_y[:, :L, :]
    if cfg["revin"]:
        mu = yl.mean(axis=1, keepdims=True)
        std = jnp.sqrt(((yl - mu) ** 2).mean(axis=1, keepdims=True) + REVIN_EPS)
        yl = (yl - mu) / std * params["revin_w"] + params["revin_b"]

    x = jnp.concatenate([proj_feature.reshape(B, -1),
                         batch_x.reshape(B, -1), yl.reshape(B, -1)], axis=1)
    for p in params["encoder"]:
        x = _resblock_ref(x, p, ln)
    for p in params["decoder"]:
        x = _resblock_ref(x, p, ln)

    dense = x.reshape(B, H, dod)
    td_in = jnp.concatenate([dense, proj_feature[:, -H:, :]], axis=2)
    td = _resblock_ref(td_in.reshape(B * H, dod + feat),
                       params["temporal"], ln).reshape(B, H, N)

    yl_t = jnp.transpose(yl, (0, 2, 1)).reshape(B * N, L)
    res = yl_t @ params["lin_w"] + params["lin_b"]
    res = jnp.transpose(res.reshape(B, N, H), (0, 2, 1))

    pred = td + res
    if cfg["revin"]:
        pred = pred - params["revin_b"]
        pred = pred / (params["revin_w"] + REVIN_EPS * REVIN_EPS)
        pred = pred * std + mu
    return pred, batch_y[:, -H:, :]


# ----------------------------------------------------------------------------
# Main
# ----------------------------------------------------------------------------
if __name__ == "__main__":
    cfg = dict(
        batch_size=2,
        label_len=8,             # L (lookback)
        pred_len=4,              # H
        n_features=4,            # lookback_shape[1]
        attr_shape=(3, 2),
        dyn_cov_shape=(12, 5),   # (L+H, Cdyn)
        feat_size=6,
        hidden_size=32,
        num_encoder_layers=2,
        num_decoder_layers=2,
        decoder_output_dim=4,
        temporal_decoder_hidden=16,
        layer_norm=True,
        revin=True,
    )
    B, L, H, N = cfg["batch_size"], cfg["label_len"], cfg["pred_len"], cfg["n_features"]
    A0, A1 = cfg["attr_shape"]
    Tdyn, Cdyn = cfg["dyn_cov_shape"]
    feat, hid, dod = cfg["feat_size"], cfg["hidden_size"], cfg["decoder_output_dim"]

    concat_shape = L * N + A0 * A1 + Tdyn * feat  # 32 + 6 + 72 = 110

    key = jax.random.PRNGKey(0)
    keys = jax.random.split(key, 16)

    enc_params = []
    fin = concat_shape
    for i in range(cfg["num_encoder_layers"]):
        enc_params.append(init_resblock_params(keys[2 + i], fin, hid, hid))
        fin = hid
    dec_params = []
    fin = hid
    for i in range(cfg["num_decoder_layers"]):
        dec_params.append(init_resblock_params(keys[6 + i], fin, hid, dod * H))
        fin = dod * H

    lin_w, lin_b = init_linear_params(keys[10], L, H)
    params = dict(
        featproj=init_resblock_params(keys[1], Cdyn, hid, feat),
        encoder=enc_params,
        decoder=dec_params,
        temporal=init_resblock_params(keys[9], feat + dod,
                                      cfg["temporal_decoder_hidden"], N),
        lin_w=lin_w,
        lin_b=lin_b,
        revin_w=jnp.ones((1, N), jnp.float32),
        revin_b=jnp.zeros((1, N), jnp.float32),
    )

    batch_x = jax.random.normal(keys[11], (B, A0, A1), jnp.float32)
    batch_y = jax.random.normal(keys[12], (B, L + H, N), jnp.float32)
    batch_x_mark = jax.random.normal(keys[13], (B, Tdyn, Cdyn), jnp.float32)
    batch_y_mark = jax.random.normal(keys[14], (B, Tdyn, Cdyn), jnp.float32)

    pred, ans = tide_forward(params, batch_x, batch_y, batch_x_mark, batch_y_mark, cfg)
    pred = jax.block_until_ready(pred)
    ans = jax.block_until_ready(ans)

    pred_ref, ans_ref = ref_forward(params, batch_x, batch_y,
                                    batch_x_mark, batch_y_mark, cfg)

    assert pred.shape == (B, H, N) and ans.shape == (B, H, N)
    assert jnp.allclose(pred, pred_ref, atol=2e-2, rtol=2e-2), "pred mismatch vs reference"
    assert jnp.allclose(ans, ans_ref), "ans mismatch vs reference"

    print("KERNEL_OK")
</pallas_src>

<mosaic_0001>
module attributes {stable_mosaic.version = 11 : i64} {
  func.func @kernel(%arg0: memref<2x60xf32, #tpu.memory_space<vmem>>, %arg1: memref<2x6xf32, #tpu.memory_space<vmem>>, %arg2: memref<2x48xf32, #tpu.memory_space<vmem>>, %arg3: memref<60x384xf32, #tpu.memory_space<vmem>>, %arg4: memref<1x384xf32, #tpu.memory_space<vmem>>, %arg5: memref<384x72xf32, #tpu.memory_space<vmem>>, %arg6: memref<1x72xf32, #tpu.memory_space<vmem>>, %arg7: memref<60x72xf32, #tpu.memory_space<vmem>>, %arg8: memref<1x72xf32, #tpu.memory_space<vmem>>, %arg9: memref<1x72xf32, #tpu.memory_space<vmem>>, %arg10: memref<1x72xf32, #tpu.memory_space<vmem>>, %arg11: memref<72x12xf32, #tpu.memory_space<vmem>>, %arg12: memref<12x72xf32, #tpu.memory_space<vmem>>, %arg13: memref<32x4xf32, #tpu.memory_space<vmem>>, %arg14: memref<4x32xf32, #tpu.memory_space<vmem>>, %arg15: memref<4x16xf32, #tpu.memory_space<vmem>>, %arg16: memref<1x32xf32, #tpu.memory_space<vmem>>, %arg17: memref<1x32xf32, #tpu.memory_space<vmem>>, %arg18: memref<1x16xf32, #tpu.memory_space<vmem>>, %arg19: memref<1x16xf32, #tpu.memory_space<vmem>>, %arg20: memref<72x32xf32, #tpu.memory_space<vmem>>, %arg21: memref<6x32xf32, #tpu.memory_space<vmem>>, %arg22: memref<32x32xf32, #tpu.memory_space<vmem>>, %arg23: memref<1x32xf32, #tpu.memory_space<vmem>>, %arg24: memref<32x32xf32, #tpu.memory_space<vmem>>, %arg25: memref<1x32xf32, #tpu.memory_space<vmem>>, %arg26: memref<72x32xf32, #tpu.memory_space<vmem>>, %arg27: memref<6x32xf32, #tpu.memory_space<vmem>>, %arg28: memref<32x32xf32, #tpu.memory_space<vmem>>, %arg29: memref<1x32xf32, #tpu.memory_space<vmem>>, %arg30: memref<1x32xf32, #tpu.memory_space<vmem>>, %arg31: memref<1x32xf32, #tpu.memory_space<vmem>>, %arg32: memref<32x32xf32, #tpu.memory_space<vmem>>, %arg33: memref<1x32xf32, #tpu.memory_space<vmem>>, %arg34: memref<32x32xf32, #tpu.memory_space<vmem>>, %arg35: memref<1x32xf32, #tpu.memory_space<vmem>>, %arg36: memref<1x32xf32, #tpu.memory_space<vmem>>, %arg37: memref<1x32xf32, #tpu.memory_space<vmem>>, %arg38: memref<32x32xf32, #tpu.memory_space<vmem>>, %arg39: memref<1x32xf32, #tpu.memory_space<vmem>>, %arg40: memref<32x16xf32, #tpu.memory_space<vmem>>, %arg41: memref<1x16xf32, #tpu.memory_space<vmem>>, %arg42: memref<32x16xf32, #tpu.memory_space<vmem>>, %arg43: memref<1x16xf32, #tpu.memory_space<vmem>>, %arg44: memref<1x16xf32, #tpu.memory_space<vmem>>, %arg45: memref<1x16xf32, #tpu.memory_space<vmem>>, %arg46: memref<16x32xf32, #tpu.memory_space<vmem>>, %arg47: memref<1x32xf32, #tpu.memory_space<vmem>>, %arg48: memref<32x16xf32, #tpu.memory_space<vmem>>, %arg49: memref<1x16xf32, #tpu.memory_space<vmem>>, %arg50: memref<1x16xf32, #tpu.memory_space<vmem>>, %arg51: memref<1x16xf32, #tpu.memory_space<vmem>>, %arg52: memref<16x64xf32, #tpu.memory_space<vmem>>, %arg53: memref<24x64xf32, #tpu.memory_space<vmem>>, %arg54: memref<1x64xf32, #tpu.memory_space<vmem>>, %arg55: memref<64x16xf32, #tpu.memory_space<vmem>>, %arg56: memref<1x16xf32, #tpu.memory_space<vmem>>, %arg57: memref<16x16xf32, #tpu.memory_space<vmem>>, %arg58: memref<24x16xf32, #tpu.memory_space<vmem>>, %arg59: memref<1x16xf32, #tpu.memory_space<vmem>>, %arg60: memref<1x16xf32, #tpu.memory_space<vmem>>, %arg61: memref<1x16xf32, #tpu.memory_space<vmem>>, %arg62: memref<16x4xf32, #tpu.memory_space<vmem>>, %arg63: memref<4x16xf32, #tpu.memory_space<vmem>>, %arg64: memref<32x16xf32, #tpu.memory_space<vmem>>, %arg65: memref<1x16xf32, #tpu.memory_space<vmem>>, %arg66: memref<2x16xf32, #tpu.memory_space<vmem>>) attributes {dimension_semantics = [], scalar_prefetch = 0 : i64, scratch_operands = 0 : i64, tpu.core_type = #tpu.core_type<tc>} {
    %c0 = arith.constant 0 : index
    %c0_0 = arith.constant 0 : index
    %0 = vector.load %arg0[%c0, %c0_0] : memref<2x60xf32, #tpu.memory_space<vmem>>, vector<2x60xf32>
    %c0_1 = arith.constant 0 : index
    %c0_2 = arith.constant 0 : index
    %1 = vector.load %arg1[%c0_1, %c0_2] : memref<2x6xf32, #tpu.memory_space<vmem>>, vector<2x6xf32>
    %c0_3 = arith.constant 0 : index
    %c0_4 = arith.constant 0 : index
    %2 = vector.load %arg2[%c0_3, %c0_4] : memref<2x48xf32, #tpu.memory_space<vmem>>, vector<2x48xf32>
    %c0_5 = arith.constant 0 : index
    %c0_6 = arith.constant 0 : index
    %3 = vector.load %arg3[%c0_5, %c0_6] : memref<60x384xf32, #tpu.memory_space<vmem>>, vector<60x384xf32>
    %c0_7 = arith.constant 0 : index
    %c0_8 = arith.constant 0 : index
    %4 = vector.load %arg4[%c0_7, %c0_8] : memref<1x384xf32, #tpu.memory_space<vmem>>, vector<1x384xf32>
    %c0_9 = arith.constant 0 : index
    %c0_10 = arith.constant 0 : index
    %5 = vector.load %arg5[%c0_9, %c0_10] : memref<384x72xf32, #tpu.memory_space<vmem>>, vector<384x72xf32>
    %c0_11 = arith.constant 0 : index
    %c0_12 = arith.constant 0 : index
    %6 = vector.load %arg6[%c0_11, %c0_12] : memref<1x72xf32, #tpu.memory_space<vmem>>, vector<1x72xf32>
    %c0_13 = arith.constant 0 : index
    %c0_14 = arith.constant 0 : index
    %7 = vector.load %arg7[%c0_13, %c0_14] : memref<60x72xf32, #tpu.memory_space<vmem>>, vector<60x72xf32>
    %c0_15 = arith.constant 0 : index
    %c0_16 = arith.constant 0 : index
    %8 = vector.load %arg8[%c0_15, %c0_16] : memref<1x72xf32, #tpu.memory_space<vmem>>, vector<1x72xf32>
    %c0_17 = arith.constant 0 : index
    %c0_18 = arith.constant 0 : index
    %9 = vector.load %arg9[%c0_17, %c0_18] : memref<1x72xf32, #tpu.memory_space<vmem>>, vector<1x72xf32>
    %c0_19 = arith.constant 0 : index
    %c0_20 = arith.constant 0 : index
    %10 = vector.load %arg10[%c0_19, %c0_20] : memref<1x72xf32, #tpu.memory_space<vmem>>, vector<1x72xf32>
    %c0_21 = arith.constant 0 : index
    %c0_22 = arith.constant 0 : index
    %11 = vector.load %arg11[%c0_21, %c0_22] : memref<72x12xf32, #tpu.memory_space<vmem>>, vector<72x12xf32>
    %c0_23 = arith.constant 0 : index
    %c0_24 = arith.constant 0 : index
    %12 = vector.load %arg12[%c0_23, %c0_24] : memref<12x72xf32, #tpu.memory_space<vmem>>, vector<12x72xf32>
    %cst = arith.constant dense<0.000000e+00> : vector<2x384xf32>
    %13 = tpu.matmul %0, %3, %cst {dimension_numbers = #tpu.dot_dimension_numbers<[1], [0], [0], [1], [0, 0, 1, 1], [], []>} : vector<2x60xf32>, vector<60x384xf32>, vector<2x384xf32> -> vector<2x384xf32>
    %14 = vector.broadcast %4 : vector<1x384xf32> to vector<2x384xf32>
    %15 = arith.addf %13, %14 : vector<2x384xf32>
    %cst_25 = arith.constant 0.000000e+00 : f32
    %16 = vector.broadcast %cst_25 : f32 to vector<2x384xf32>
    %17 = arith.maximumf %15, %16 : vector<2x384xf32>
    %cst_26 = arith.constant dense<0.000000e+00> : vector<2x72xf32>
    %18 = tpu.matmul %17, %5, %cst_26 {dimension_numbers = #tpu.dot_dimension_numbers<[1], [0], [0], [1], [0, 0, 1, 1], [], []>} : vector<2x384xf32>, vector<384x72xf32>, vector<2x72xf32> -> vector<2x72xf32>
    %19 = vector.broadcast %6 : vector<1x72xf32> to vector<2x72xf32>
    %20 = arith.addf %18, %19 : vector<2x72xf32>
    %cst_27 = arith.constant dense<0.000000e+00> : vector<2x72xf32>
    %21 = tpu.matmul %0, %7, %cst_27 {dimension_numbers = #tpu.dot_dimension_numbers<[1], [0], [0], [1], [0, 0, 1, 1], [], []>} : vector<2x60xf32>, vector<60x72xf32>, vector<2x72xf32> -> vector<2x72xf32>
    %22 = vector.broadcast %8 : vector<1x72xf32> to vector<2x72xf32>
    %23 = arith.addf %21, %22 : vector<2x72xf32>
    %24 = arith.addf %20, %23 : vector<2x72xf32>
    %cst_28 = arith.constant dense<0.000000e+00> : vector<2x12xf32>
    %25 = tpu.matmul %24, %11, %cst_28 {dimension_numbers = #tpu.dot_dimension_numbers<[1], [0], [0], [1], [0, 0, 1, 1], [], []>} : vector<2x72xf32>, vector<72x12xf32>, vector<2x12xf32> -> vector<2x12xf32>
    %cst_29 = arith.constant dense<0.000000e+00> : vector<2x72xf32>
    %26 = tpu.matmul %25, %12, %cst_29 {dimension_numbers = #tpu.dot_dimension_numbers<[1], [0], [0], [1], [0, 0, 1, 1], [], []>} : vector<2x12xf32>, vector<12x72xf32>, vector<2x72xf32> -> vector<2x72xf32>
    %27 = arith.subf %24, %26 : vector<2x72xf32>
    %28 = arith.mulf %27, %27 : vector<2x72xf32>
    %cst_30 = arith.constant dense<0.000000e+00> : vector<2x12xf32>
    %29 = tpu.matmul %28, %11, %cst_30 {dimension_numbers = #tpu.dot_dimension_numbers<[1], [0], [0], [1], [0, 0, 1, 1], [], []>} : vector<2x72xf32>, vector<72x12xf32>, vector<2x12xf32> -> vector<2x12xf32>
    %cst_31 = arith.constant 9.99999974E-6 : f32
    %30 = vector.broadcast %cst_31 : f32 to vector<2x12xf32>
    %31 = arith.addf %29, %30 : vector<2x12xf32>
    %32 = math.rsqrt %31 : vector<2x12xf32>
    %cst_32 = arith.constant dense<0.000000e+00> : vector<2x72xf32>
    %33 = tpu.matmul %32, %12, %cst_32 {dimension_numbers = #tpu.dot_dimension_numbers<[1], [0], [0], [1], [0, 0, 1, 1], [], []>} : vector<2x12xf32>, vector<12x72xf32>, vector<2x72xf32> -> vector<2x72xf32>
    %34 = arith.mulf %27, %33 : vector<2x72xf32>
    %35 = vector.broadcast %9 : vector<1x72xf32> to vector<2x72xf32>
    %36 = arith.mulf %34, %35 : vector<2x72xf32>
    %37 = vector.broadcast %10 : vector<1x72xf32> to vector<2x72xf32>
    %38 = arith.addf %36, %37 : vector<2x72xf32>
    %39 = vector.extract_strided_slice %2 {offsets = [0, 0], sizes = [2, 32], strides = [1, 1]} : vector<2x48xf32> to vector<2x32xf32>
    %c0_33 = arith.constant 0 : index
    %c0_34 = arith.constant 0 : index
    %40 = vector.load %arg13[%c0_33, %c0_34] : memref<32x4xf32, #tpu.memory_space<vmem>>, vector<32x4xf32>
    %c0_35 = arith.constant 0 : index
    %c0_36 = arith.constant 0 : index
    %41 = vector.load %arg14[%c0_35, %c0_36] : memref<4x32xf32, #tpu.memory_space<vmem>>, vector<4x32xf32>
    %c0_37 = arith.constant 0 : index
    %c0_38 = arith.constant 0 : index
    %42 = vector.load %arg15[%c0_37, %c0_38] : memref<4x16xf32, #tpu.memory_space<vmem>>, vector<4x16xf32>
    %c0_39 = arith.constant 0 : index
    %c0_40 = arith.constant 0 : index
    %43 = vector.load %arg16[%c0_39, %c0_40] : memref<1x32xf32, #tpu.memory_space<vmem>>, vector<1x32xf32>
    %c0_41 = arith.constant 0 : index
    %c0_42 = arith.constant 0 : index
    %44 = vector.load %arg17[%c0_41, %c0_42] : memref<1x32xf32, #tpu.memory_space<vmem>>, vector<1x32xf32>
    %c0_43 = arith.constant 0 : index
    %c0_44 = arith.constant 0 : index
    %45 = vector.load %arg18[%c0_43, %c0_44] : memref<1x16xf32, #tpu.memory_space<vmem>>, vector<1x16xf32>
    %c0_45 = arith.constant 0 : index
    %c0_46 = arith.constant 0 : index
    %46 = vector.load %arg19[%c0_45, %c0_46] : memref<1x16xf32, #tpu.memory_space<vmem>>, vector<1x16xf32>
    %cst_47 = arith.constant dense<0.000000e+00> : vector<2x4xf32>
    %47 = tpu.matmul %39, %40, %cst_47 {dimension_numbers = #tpu.dot_dimension_numbers<[1], [0], [0], [1], [0, 0, 1, 1], [], []>} : vector<2x32xf32>, vector<32x4xf32>, vector<2x4xf32> -> vector<2x4xf32>
    %cst_48 = arith.constant dense<0.000000e+00> : vector<2x32xf32>
    %48 = tpu.matmul %47, %41, %cst_48 {dimension_numbers = #tpu.dot_dimension_numbers<[1], [0], [0], [1], [0, 0, 1, 1], [], []>} : vector<2x4xf32>, vector<4x32xf32>, vector<2x32xf32> -> vector<2x32xf32>
    %49 = arith.subf %39, %48 : vector<2x32xf32>
    %50 = arith.mulf %49, %49 : vector<2x32xf32>
    %cst_49 = arith.constant dense<0.000000e+00> : vector<2x4xf32>
    %51 = tpu.matmul %50, %40, %cst_49 {dimension_numbers = #tpu.dot_dimension_numbers<[1], [0], [0], [1], [0, 0, 1, 1], [], []>} : vector<2x32xf32>, vector<32x4xf32>, vector<2x4xf32> -> vector<2x4xf32>
    %cst_50 = arith.constant 9.99999974E-6 : f32
    %52 = vector.broadcast %cst_50 : f32 to vector<2x4xf32>
    %53 = arith.addf %51, %52 : vector<2x4xf32>
    %54 = math.rsqrt %53 : vector<2x4xf32>
    %cst_51 = arith.constant dense<0.000000e+00> : vector<2x32xf32>
    %55 = tpu.matmul %54, %41, %cst_51 {dimension_numbers = #tpu.dot_dimension_numbers<[1], [0], [0], [1], [0, 0, 1, 1], [], []>} : vector<2x4xf32>, vector<4x32xf32>, vector<2x32xf32> -> vector<2x32xf32>
    %56 = arith.mulf %49, %55 : vector<2x32xf32>
    %57 = vector.broadcast %43 : vector<1x32xf32> to vector<2x32xf32>
    %58 = arith.mulf %56, %57 : vector<2x32xf32>
    %59 = vector.broadcast %44 : vector<1x32xf32> to vector<2x32xf32>
    %60 = arith.addf %58, %59 : vector<2x32xf32>
    %c0_52 = arith.constant 0 : index
    %c0_53 = arith.constant 0 : index
    %61 = vector.load %arg20[%c0_52, %c0_53] : memref<72x32xf32, #tpu.memory_space<vmem>>, vector<72x32xf32>
    %c0_54 = arith.constant 0 : index
    %c0_55 = arith.constant 0 : index
    %62 = vector.load %arg21[%c0_54, %c0_55] : memref<6x32xf32, #tpu.memory_space<vmem>>, vector<6x32xf32>
    %c0_56 = arith.constant 0 : index
    %c0_57 = arith.constant 0 : index
    %63 = vector.load %arg22[%c0_56, %c0_57] : memref<32x32xf32, #tpu.memory_space<vmem>>, vector<32x32xf32>
    %c0_58 = arith.constant 0 : index
    %c0_59 = arith.constant 0 : index
    %64 = vector.load %arg23[%c0_58, %c0_59] : memref<1x32xf32, #tpu.memory_space<vmem>>, vector<1x32xf32>
    %c0_60 = arith.constant 0 : index
    %c0_61 = arith.constant 0 : index
    %65 = vector.load %arg24[%c0_60, %c0_61] : memref<32x32xf32, #tpu.memory_space<vmem>>, vector<32x32xf32>
    %c0_62 = arith.constant 0 : index
    %c0_63 = arith.constant 0 : index
    %66 = vector.load %arg25[%c0_62, %c0_63] : memref<1x32xf32, #tpu.memory_space<vmem>>, vector<1x32xf32>
    %c0_64 = arith.constant 0 : index
    %c0_65 = arith.constant 0 : index
    %67 = vector.load %arg26[%c0_64, %c0_65] : memref<72x32xf32, #tpu.memory_space<vmem>>, vector<72x32xf32>
    %c0_66 = arith.constant 0 : index
    %c0_67 = arith.constant 0 : index
    %68 = vector.load %arg27[%c0_66, %c0_67] : memref<6x32xf32, #tpu.memory_space<vmem>>, vector<6x32xf32>
    %c0_68 = arith.constant 0 : index
    %c0_69 = arith.constant 0 : index
    %69 = vector.load %arg28[%c0_68, %c0_69] : memref<32x32xf32, #tpu.memory_space<vmem>>, vector<32x32xf32>
    %c0_70 = arith.constant 0 : index
    %c0_71 = arith.constant 0 : index
    %70 = vector.load %arg29[%c0_70, %c0_71] : memref<1x32xf32, #tpu.memory_space<vmem>>, vector<1x32xf32>
    %c0_72 = arith.constant 0 : index
    %c0_73 = arith.constant 0 : index
    %71 = vector.load %arg30[%c0_72, %c0_73] : memref<1x32xf32, #tpu.memory_space<vmem>>, vector<1x32xf32>
    %c0_74 = arith.constant 0 : index
    %c0_75 = arith.constant 0 : index
    %72 = vector.load %arg31[%c0_74, %c0_75] : memref<1x32xf32, #tpu.memory_space<vmem>>, vector<1x32xf32>
    %cst_76 = arith.constant dense<0.000000e+00> : vector<2x32xf32>
    %73 = tpu.matmul %38, %61, %cst_76 {dimension_numbers = #tpu.dot_dimension_numbers<[1], [0], [0], [1], [0, 0, 1, 1], [], []>} : vector<2x72xf32>, vector<72x32xf32>, vector<2x32xf32> -> vector<2x32xf32>
    %cst_77 = arith.constant dense<0.000000e+00> : vector<2x32xf32>
    %74 = tpu.matmul %1, %62, %cst_77 {dimension_numbers = #tpu.dot_dimension_numbers<[1], [0], [0], [1], [0, 0, 1, 1], [], []>} : vector<2x6xf32>, vector<6x32xf32>, vector<2x32xf32> -> vector<2x32xf32>
    %75 = arith.addf %73, %74 : vector<2x32xf32>
    %cst_78 = arith.constant dense<0.000000e+00> : vector<2x32xf32>
    %76 = tpu.matmul %60, %63, %cst_78 {dimension_numbers = #tpu.dot_dimension_numbers<[1], [0], [0], [1], [0, 0, 1, 1], [], []>} : vector<2x32xf32>, vector<32x32xf32>, vector<2x32xf32> -> vector<2x32xf32>
    %77 = arith.addf %75, %76 : vector<2x32xf32>
    %78 = vector.broadcast %64 : vector<1x32xf32> to vector<2x32xf32>
    %79 = arith.addf %77, %78 : vector<2x32xf32>
    %cst_79 = arith.constant 0.000000e+00 : f32
    %80 = vector.broadcast %cst_79 : f32 to vector<2x32xf32>
    %81 = arith.maximumf %79, %80 : vector<2x32xf32>
    %cst_80 = arith.constant dense<0.000000e+00> : vector<2x32xf32>
    %82 = tpu.matmul %81, %65, %cst_80 {dimension_numbers = #tpu.dot_dimension_numbers<[1], [0], [0], [1], [0, 0, 1, 1], [], []>} : vector<2x32xf32>, vector<32x32xf32>, vector<2x32xf32> -> vector<2x32xf32>
    %83 = vector.broadcast %66 : vector<1x32xf32> to vector<2x32xf32>
    %84 = arith.addf %82, %83 : vector<2x32xf32>
    %cst_81 = arith.constant dense<0.000000e+00> : vector<2x32xf32>
    %85 = tpu.matmul %38, %67, %cst_81 {dimension_numbers = #tpu.dot_dimension_numbers<[1], [0], [0], [1], [0, 0, 1, 1], [], []>} : vector<2x72xf32>, vector<72x32xf32>, vector<2x32xf32> -> vector<2x32xf32>
    %86 = arith.addf %84, %85 : vector<2x32xf32>
    %cst_82 = arith.constant dense<0.000000e+00> : vector<2x32xf32>
    %87 = tpu.matmul %1, %68, %cst_82 {dimension_numbers = #tpu.dot_dimension_numbers<[1], [0], [0], [1], [0, 0, 1, 1], [], []>} : vector<2x6xf32>, vector<6x32xf32>, vector<2x32xf32> -> vector<2x32xf32>
    %88 = arith.addf %86, %87 : vector<2x32xf32>
    %cst_83 = arith.constant dense<0.000000e+00> : vector<2x32xf32>
    %89 = tpu.matmul %60, %69, %cst_83 {dimension_numbers = #tpu.dot_dimension_numbers<[1], [0], [0], [1], [0, 0, 1, 1], [], []>} : vector<2x32xf32>, vector<32x32xf32>, vector<2x32xf32> -> vector<2x32xf32>
    %90 = arith.addf %88, %89 : vector<2x32xf32>
    %91 = vector.broadcast %70 : vector<1x32xf32> to vector<2x32xf32>
    %92 = arith.addf %90, %91 : vector<2x32xf32>
    %cst_84 = arith.constant dense<0.000000e+00> : vector<2xf32>
    %93 = vector.multi_reduction <add>, %92, %cst_84 [1] : vector<2x32xf32> to vector<2xf32>
    %94 = vector.shape_cast %93 : vector<2xf32> to vector<2x1xf32>
    %cst_85 = arith.constant 3.200000e+01 : f32
    %95 = vector.broadcast %cst_85 : f32 to vector<2x1xf32>
    %96 = arith.divf %94, %95 : vector<2x1xf32>
    %97 = vector.broadcast %96 : vector<2x1xf32> to vector<2x32xf32>
    %98 = arith.subf %92, %97 : vector<2x32xf32>
    %99 = arith.mulf %98, %98 : vector<2x32xf32>
    %cst_86 = arith.constant dense<0.000000e+00> : vector<2xf32>
    %100 = vector.multi_reduction <add>, %99, %cst_86 [1] : vector<2x32xf32> to vector<2xf32>
    %101 = vector.shape_cast %100 : vector<2xf32> to vector<2x1xf32>
    %cst_87 = arith.constant 3.200000e+01 : f32
    %102 = vector.broadcast %cst_87 : f32 to vector<2x1xf32>
    %103 = arith.divf %101, %102 : vector<2x1xf32>
    %cst_88 = arith.constant 9.99999974E-6 : f32
    %104 = vector.broadcast %cst_88 : f32 to vector<2x1xf32>
    %105 = arith.addf %103, %104 : vector<2x1xf32>
    %106 = math.rsqrt %105 : vector<2x1xf32>
    %107 = vector.broadcast %106 : vector<2x1xf32> to vector<2x32xf32>
    %108 = arith.mulf %98, %107 : vector<2x32xf32>
    %109 = vector.broadcast %71 : vector<1x32xf32> to vector<2x32xf32>
    %110 = arith.mulf %108, %109 : vector<2x32xf32>
    %111 = vector.broadcast %72 : vector<1x32xf32> to vector<2x32xf32>
    %112 = arith.addf %110, %111 : vector<2x32xf32>
    %c0_89 = arith.constant 0 : index
    %c0_90 = arith.constant 0 : index
    %113 = vector.load %arg32[%c0_89, %c0_90] : memref<32x32xf32, #tpu.memory_space<vmem>>, vector<32x32xf32>
    %c0_91 = arith.constant 0 : index
    %c0_92 = arith.constant 0 : index
    %114 = vector.load %arg33[%c0_91, %c0_92] : memref<1x32xf32, #tpu.memory_space<vmem>>, vector<1x32xf32>
    %c0_93 = arith.constant 0 : index
    %c0_94 = arith.constant 0 : index
    %115 = vector.load %arg34[%c0_93, %c0_94] : memref<32x32xf32, #tpu.memory_space<vmem>>, vector<32x32xf32>
    %c0_95 = arith.constant 0 : index
    %c0_96 = arith.constant 0 : index
    %116 = vector.load %arg35[%c0_95, %c0_96] : memref<1x32xf32, #tpu.memory_space<vmem>>, vector<1x32xf32>
    %c0_97 = arith.constant 0 : index
    %c0_98 = arith.constant 0 : index
    %117 = vector.load %arg36[%c0_97, %c0_98] : memref<1x32xf32, #tpu.memory_space<vmem>>, vector<1x32xf32>
    %c0_99 = arith.constant 0 : index
    %c0_100 = arith.constant 0 : index
    %118 = vector.load %arg37[%c0_99, %c0_100] : memref<1x32xf32, #tpu.memory_space<vmem>>, vector<1x32xf32>
    %cst_101 = arith.constant dense<0.000000e+00> : vector<2x32xf32>
    %119 = tpu.matmul %112, %113, %cst_101 {dimension_numbers = #tpu.dot_dimension_numbers<[1], [0], [0], [1], [0, 0, 1, 1], [], []>} : vector<2x32xf32>, vector<32x32xf32>, vector<2x32xf32> -> vector<2x32xf32>
    %120 = vector.broadcast %114 : vector<1x32xf32> to vector<2x32xf32>
    %121 = arith.addf %119, %120 : vector<2x32xf32>
    %cst_102 = arith.constant 0.000000e+00 : f32
    %122 = vector.broadcast %cst_102 : f32 to vector<2x32xf32>
    %123 = arith.maximumf %121, %122 : vector<2x32xf32>
    %cst_103 = arith.constant dense<0.000000e+00> : vector<2x32xf32>
    %124 = tpu.matmul %123, %115, %cst_103 {dimension_numbers = #tpu.dot_dimension_numbers<[1], [0], [0], [1], [0, 0, 1, 1], [], []>} : vector<2x32xf32>, vector<32x32xf32>, vector<2x32xf32> -> vector<2x32xf32>
    %125 = vector.broadcast %116 : vector<1x32xf32> to vector<2x32xf32>
    %126 = arith.addf %124, %125 : vector<2x32xf32>
    %127 = arith.addf %126, %112 : vector<2x32xf32>
    %cst_104 = arith.constant dense<0.000000e+00> : vector<2xf32>
    %128 = vector.multi_reduction <add>, %127, %cst_104 [1] : vector<2x32xf32> to vector<2xf32>
    %129 = vector.shape_cast %128 : vector<2xf32> to vector<2x1xf32>
    %cst_105 = arith.constant 3.200000e+01 : f32
    %130 = vector.broadcast %cst_105 : f32 to vector<2x1xf32>
    %131 = arith.divf %129, %130 : vector<2x1xf32>
    %132 = vector.broadcast %131 : vector<2x1xf32> to vector<2x32xf32>
    %133 = arith.subf %127, %132 : vector<2x32xf32>
    %134 = arith.mulf %133, %133 : vector<2x32xf32>
    %cst_106 = arith.constant dense<0.000000e+00> : vector<2xf32>
    %135 = vector.multi_reduction <add>, %134, %cst_106 [1] : vector<2x32xf32> to vector<2xf32>
    %136 = vector.shape_cast %135 : vector<2xf32> to vector<2x1xf32>
    %cst_107 = arith.constant 3.200000e+01 : f32
    %137 = vector.broadcast %cst_107 : f32 to vector<2x1xf32>
    %138 = arith.divf %136, %137 : vector<2x1xf32>
    %cst_108 = arith.constant 9.99999974E-6 : f32
    %139 = vector.broadcast %cst_108 : f32 to vector<2x1xf32>
    %140 = arith.addf %138, %139 : vector<2x1xf32>
    %141 = math.rsqrt %140 : vector<2x1xf32>
    %142 = vector.broadcast %141 : vector<2x1xf32> to vector<2x32xf32>
    %143 = arith.mulf %133, %142 : vector<2x32xf32>
    %144 = vector.broadcast %117 : vector<1x32xf32> to vector<2x32xf32>
    %145 = arith.mulf %143, %144 : vector<2x32xf32>
    %146 = vector.broadcast %118 : vector<1x32xf32> to vector<2x32xf32>
    %147 = arith.addf %145, %146 : vector<2x32xf32>
    %c0_109 = arith.constant 0 : index
    %c0_110 = arith.constant 0 : index
    %148 = vector.load %arg38[%c0_109, %c0_110] : memref<32x32xf32, #tpu.memory_space<vmem>>, vector<32x32xf32>
    %c0_111 = arith.constant 0 : index
    %c0_112 = arith.constant 0 : index
    %149 = vector.load %arg39[%c0_111, %c0_112] : memref<1x32xf32, #tpu.memory_space<vmem>>, vector<1x32xf32>
    %c0_113 = arith.constant 0 : index
    %c0_114 = arith.constant 0 : index
    %150 = vector.load %arg40[%c0_113, %c0_114] : memref<32x16xf32, #tpu.memory_space<vmem>>, vector<32x16xf32>
    %c0_115 = arith.constant 0 : index
    %c0_116 = arith.constant 0 : index
    %151 = vector.load %arg41[%c0_115, %c0_116] : memref<1x16xf32, #tpu.memory_space<vmem>>, vector<1x16xf32>
    %c0_117 = arith.constant 0 : index
    %c0_118 = arith.constant 0 : index
    %152 = vector.load %arg42[%c0_117, %c0_118] : memref<32x16xf32, #tpu.memory_space<vmem>>, vector<32x16xf32>
    %c0_119 = arith.constant 0 : index
    %c0_120 = arith.constant 0 : index
    %153 = vector.load %arg43[%c0_119, %c0_120] : memref<1x16xf32, #tpu.memory_space<vmem>>, vector<1x16xf32>
    %c0_121 = arith.constant 0 : index
    %c0_122 = arith.constant 0 : index
    %154 = vector.load %arg44[%c0_121, %c0_122] : memref<1x16xf32, #tpu.memory_space<vmem>>, vector<1x16xf32>
    %c0_123 = arith.constant 0 : index
    %c0_124 = arith.constant 0 : index
    %155 = vector.load %arg45[%c0_123, %c0_124] : memref<1x16xf32, #tpu.memory_space<vmem>>, vector<1x16xf32>
    %cst_125 = arith.constant dense<0.000000e+00> : vector<2x32xf32>
    %156 = tpu.matmul %147, %148, %cst_125 {dimension_numbers = #tpu.dot_dimension_numbers<[1], [0], [0], [1], [0, 0, 1, 1], [], []>} : vector<2x32xf32>, vector<32x32xf32>, vector<2x32xf32> -> vector<2x32xf32>
    %157 = vector.broadcast %149 : vector<1x32xf32> to vector<2x32xf32>
    %158 = arith.addf %156, %157 : vector<2x32xf32>
    %cst_126 = arith.constant 0.000000e+00 : f32
    %159 = vector.broadcast %cst_126 : f32 to vector<2x32xf32>
    %160 = arith.maximumf %158, %159 : vector<2x32xf32>
    %cst_127 = arith.constant dense<0.000000e+00> : vector<2x16xf32>
    %161 = tpu.matmul %160, %150, %cst_127 {dimension_numbers = #tpu.dot_dimension_numbers<[1], [0], [0], [1], [0, 0, 1, 1], [], []>} : vector<2x32xf32>, vector<32x16xf32>, vector<2x16xf32> -> vector<2x16xf32>
    %162 = vector.broadcast %151 : vector<1x16xf32> to vector<2x16xf32>
    %163 = arith.addf %161, %162 : vector<2x16xf32>
    %cst_128 = arith.constant dense<0.000000e+00> : vector<2x16xf32>
    %164 = tpu.matmul %147, %152, %cst_128 {dimension_numbers = #tpu.dot_dimension_numbers<[1], [0], [0], [1], [0, 0, 1, 1], [], []>} : vector<2x32xf32>, vector<32x16xf32>, vector<2x16xf32> -> vector<2x16xf32>
    %165 = vector.broadcast %153 : vector<1x16xf32> to vector<2x16xf32>
    %166 = arith.addf %164, %165 : vector<2x16xf32>
    %167 = arith.addf %163, %166 : vector<2x16xf32>
    %cst_129 = arith.constant dense<0.000000e+00> : vector<2xf32>
    %168 = vector.multi_reduction <add>, %167, %cst_129 [1] : vector<2x16xf32> to vector<2xf32>
    %169 = vector.shape_cast %168 : vector<2xf32> to vector<2x1xf32>
    %cst_130 = arith.constant 1.600000e+01 : f32
    %170 = vector.broadcast %cst_130 : f32 to vector<2x1xf32>
    %171 = arith.divf %169, %170 : vector<2x1xf32>
    %172 = vector.broadcast %171 : vector<2x1xf32> to vector<2x16xf32>
    %173 = arith.subf %167, %172 : vector<2x16xf32>
    %174 = arith.mulf %173, %173 : vector<2x16xf32>
    %cst_131 = arith.constant dense<0.000000e+00> : vector<2xf32>
    %175 = vector.multi_reduction <add>, %174, %cst_131 [1] : vector<2x16xf32> to vector<2xf32>
    %176 = vector.shape_cast %175 : vector<2xf32> to vector<2x1xf32>
    %cst_132 = arith.constant 1.600000e+01 : f32
    %177 = vector.broadcast %cst_132 : f32 to vector<2x1xf32>
    %178 = arith.divf %176, %177 : vector<2x1xf32>
    %cst_133 = arith.constant 9.99999974E-6 : f32
    %179 = vector.broadcast %cst_133 : f32 to vector<2x1xf32>
    %180 = arith.addf %178, %179 : vector<2x1xf32>
    %181 = math.rsqrt %180 : vector<2x1xf32>
    %182 = vector.broadcast %181 : vector<2x1xf32> to vector<2x16xf32>
    %183 = arith.mulf %173, %182 : vector<2x16xf32>
    %184 = vector.broadcast %154 : vector<1x16xf32> to vector<2x16xf32>
    %185 = arith.mulf %183, %184 : vector<2x16xf32>
    %186 = vector.broadcast %155 : vector<1x16xf32> to vector<2x16xf32>
    %187 = arith.addf %185, %186 : vector<2x16xf32>
    %c0_134 = arith.constant 0 : index
    %c0_135 = arith.constant 0 : index
    %188 = vector.load %arg46[%c0_134, %c0_135] : memref<16x32xf32, #tpu.memory_space<vmem>>, vector<16x32xf32>
    %c0_136 = arith.constant 0 : index
    %c0_137 = arith.constant 0 : index
    %189 = vector.load %arg47[%c0_136, %c0_137] : memref<1x32xf32, #tpu.memory_space<vmem>>, vector<1x32xf32>
    %c0_138 = arith.constant 0 : index
    %c0_139 = arith.constant 0 : index
    %190 = vector.load %arg48[%c0_138, %c0_139] : memref<32x16xf32, #tpu.memory_space<vmem>>, vector<32x16xf32>
    %c0_140 = arith.constant 0 : index
    %c0_141 = arith.constant 0 : index
    %191 = vector.load %arg49[%c0_140, %c0_141] : memref<1x16xf32, #tpu.memory_space<vmem>>, vector<1x16xf32>
    %c0_142 = arith.constant 0 : index
    %c0_143 = arith.constant 0 : index
    %192 = vector.load %arg50[%c0_142, %c0_143] : memref<1x16xf32, #tpu.memory_space<vmem>>, vector<1x16xf32>
    %c0_144 = arith.constant 0 : index
    %c0_145 = arith.constant 0 : index
    %193 = vector.load %arg51[%c0_144, %c0_145] : memref<1x16xf32, #tpu.memory_space<vmem>>, vector<1x16xf32>
    %cst_146 = arith.constant dense<0.000000e+00> : vector<2x32xf32>
    %194 = tpu.matmul %187, %188, %cst_146 {dimension_numbers = #tpu.dot_dimension_numbers<[1], [0], [0], [1], [0, 0, 1, 1], [], []>} : vector<2x16xf32>, vector<16x32xf32>, vector<2x32xf32> -> vector<2x32xf32>
    %195 = vector.broadcast %189 : vector<1x32xf32> to vector<2x32xf32>
    %196 = arith.addf %194, %195 : vector<2x32xf32>
    %cst_147 = arith.constant 0.000000e+00 : f32
    %197 = vector.broadcast %cst_147 : f32 to vector<2x32xf32>
    %198 = arith.maximumf %196, %197 : vector<2x32xf32>
    %cst_148 = arith.constant dense<0.000000e+00> : vector<2x16xf32>
    %199 = tpu.matmul %198, %190, %cst_148 {dimension_numbers = #tpu.dot_dimension_numbers<[1], [0], [0], [1], [0, 0, 1, 1], [], []>} : vector<2x32xf32>, vector<32x16xf32>, vector<2x16xf32> -> vector<2x16xf32>
    %200 = vector.broadcast %191 : vector<1x16xf32> to vector<2x16xf32>
    %201 = arith.addf %199, %200 : vector<2x16xf32>
    %202 = arith.addf %201, %187 : vector<2x16xf32>
    %cst_149 = arith.constant dense<0.000000e+00> : vector<2xf32>
    %203 = vector.multi_reduction <add>, %202, %cst_149 [1] : vector<2x16xf32> to vector<2xf32>
    %204 = vector.shape_cast %203 : vector<2xf32> to vector<2x1xf32>
    %cst_150 = arith.constant 1.600000e+01 : f32
    %205 = vector.broadcast %cst_150 : f32 to vector<2x1xf32>
    %206 = arith.divf %204, %205 : vector<2x1xf32>
    %207 = vector.broadcast %206 : vector<2x1xf32> to vector<2x16xf32>
    %208 = arith.subf %202, %207 : vector<2x16xf32>
    %209 = arith.mulf %208, %208 : vector<2x16xf32>
    %cst_151 = arith.constant dense<0.000000e+00> : vector<2xf32>
    %210 = vector.multi_reduction <add>, %209, %cst_151 [1] : vector<2x16xf32> to vector<2xf32>
    %211 = vector.shape_cast %210 : vector<2xf32> to vector<2x1xf32>
    %cst_152 = arith.constant 1.600000e+01 : f32
    %212 = vector.broadcast %cst_152 : f32 to vector<2x1xf32>
    %213 = arith.divf %211, %212 : vector<2x1xf32>
    %cst_153 = arith.constant 9.99999974E-6 : f32
    %214 = vector.broadcast %cst_153 : f32 to vector<2x1xf32>
    %215 = arith.addf %213, %214 : vector<2x1xf32>
    %216 = math.rsqrt %215 : vector<2x1xf32>
    %217 = vector.broadcast %216 : vector<2x1xf32> to vector<2x16xf32>
    %218 = arith.mulf %208, %217 : vector<2x16xf32>
    %219 = vector.broadcast %192 : vector<1x16xf32> to vector<2x16xf32>
    %220 = arith.mulf %218, %219 : vector<2x16xf32>
    %221 = vector.broadcast %193 : vector<1x16xf32> to vector<2x16xf32>
    %222 = arith.addf %220, %221 : vector<2x16xf32>
    %223 = vector.extract_strided_slice %38 {offsets = [0, 48], sizes = [2, 24], strides = [1, 1]} : vector<2x72xf32> to vector<2x24xf32>
    %c0_154 = arith.constant 0 : index
    %c0_155 = arith.constant 0 : index
    %224 = vector.load %arg52[%c0_154, %c0_155] : memref<16x64xf32, #tpu.memory_space<vmem>>, vector<16x64xf32>
    %c0_156 = arith.constant 0 : index
    %c0_157 = arith.constant 0 : index
    %225 = vector.load %arg53[%c0_156, %c0_157] : memref<24x64xf32, #tpu.memory_space<vmem>>, vector<24x64xf32>
    %c0_158 = arith.constant 0 : index
    %c0_159 = arith.constant 0 : index
    %226 = vector.load %arg54[%c0_158, %c0_159] : memref<1x64xf32, #tpu.memory_space<vmem>>, vector<1x64xf32>
    %c0_160 = arith.constant 0 : index
    %c0_161 = arith.constant 0 : index
    %227 = vector.load %arg55[%c0_160, %c0_161] : memref<64x16xf32, #tpu.memory_space<vmem>>, vector<64x16xf32>
    %c0_162 = arith.constant 0 : index
    %c0_163 = arith.constant 0 : index
    %228 = vector.load %arg56[%c0_162, %c0_163] : memref<1x16xf32, #tpu.memory_space<vmem>>, vector<1x16xf32>
    %c0_164 = arith.constant 0 : index
    %c0_165 = arith.constant 0 : index
    %229 = vector.load %arg57[%c0_164, %c0_165] : memref<16x16xf32, #tpu.memory_space<vmem>>, vector<16x16xf32>
    %c0_166 = arith.constant 0 : index
    %c0_167 = arith.constant 0 : index
    %230 = vector.load %arg58[%c0_166, %c0_167] : memref<24x16xf32, #tpu.memory_space<vmem>>, vector<24x16xf32>
    %c0_168 = arith.constant 0 : index
    %c0_169 = arith.constant 0 : index
    %231 = vector.load %arg59[%c0_168, %c0_169] : memref<1x16xf32, #tpu.memory_space<vmem>>, vector<1x16xf32>
    %c0_170 = arith.constant 0 : index
    %c0_171 = arith.constant 0 : index
    %232 = vector.load %arg60[%c0_170, %c0_171] : memref<1x16xf32, #tpu.memory_space<vmem>>, vector<1x16xf32>
    %c0_172 = arith.constant 0 : index
    %c0_173 = arith.constant 0 : index
    %233 = vector.load %arg61[%c0_172, %c0_173] : memref<1x16xf32, #tpu.memory_space<vmem>>, vector<1x16xf32>
    %c0_174 = arith.constant 0 : index
    %c0_175 = arith.constant 0 : index
    %234 = vector.load %arg62[%c0_174, %c0_175] : memref<16x4xf32, #tpu.memory_space<vmem>>, vector<16x4xf32>
    %c0_176 = arith.constant 0 : index
    %c0_177 = arith.constant 0 : index
    %235 = vector.load %arg63[%c0_176, %c0_177] : memref<4x16xf32, #tpu.memory_space<vmem>>, vector<4x16xf32>
    %cst_178 = arith.constant dense<0.000000e+00> : vector<2x64xf32>
    %236 = tpu.matmul %222, %224, %cst_178 {dimension_numbers = #tpu.dot_dimension_numbers<[1], [0], [0], [1], [0, 0, 1, 1], [], []>} : vector<2x16xf32>, vector<16x64xf32>, vector<2x64xf32> -> vector<2x64xf32>
    %cst_179 = arith.constant dense<0.000000e+00> : vector<2x64xf32>
    %237 = tpu.matmul %223, %225, %cst_179 {dimension_numbers = #tpu.dot_dimension_numbers<[1], [0], [0], [1], [0, 0, 1, 1], [], []>} : vector<2x24xf32>, vector<24x64xf32>, vector<2x64xf32> -> vector<2x64xf32>
    %238 = arith.addf %236, %237 : vector<2x64xf32>
    %239 = vector.broadcast %226 : vector<1x64xf32> to vector<2x64xf32>
    %240 = arith.addf %238, %239 : vector<2x64xf32>
    %cst_180 = arith.constant 0.000000e+00 : f32
    %241 = vector.broadcast %cst_180 : f32 to vector<2x64xf32>
    %242 = arith.maximumf %240, %241 : vector<2x64xf32>
    %cst_181 = arith.constant dense<0.000000e+00> : vector<2x16xf32>
    %243 = tpu.matmul %242, %227, %cst_181 {dimension_numbers = #tpu.dot_dimension_numbers<[1], [0], [0], [1], [0, 0, 1, 1], [], []>} : vector<2x64xf32>, vector<64x16xf32>, vector<2x16xf32> -> vector<2x16xf32>
    %244 = vector.broadcast %228 : vector<1x16xf32> to vector<2x16xf32>
    %245 = arith.addf %243, %244 : vector<2x16xf32>
    %cst_182 = arith.constant dense<0.000000e+00> : vector<2x16xf32>
    %246 = tpu.matmul %222, %229, %cst_182 {dimension_numbers = #tpu.dot_dimension_numbers<[1], [0], [0], [1], [0, 0, 1, 1], [], []>} : vector<2x16xf32>, vector<16x16xf32>, vector<2x16xf32> -> vector<2x16xf32>
    %247 = arith.addf %245, %246 : vector<2x16xf32>
    %cst_183 = arith.constant dense<0.000000e+00> : vector<2x16xf32>
    %248 = tpu.matmul %223, %230, %cst_183 {dimension_numbers = #tpu.dot_dimension_numbers<[1], [0], [0], [1], [0, 0, 1, 1], [], []>} : vector<2x24xf32>, vector<24x16xf32>, vector<2x16xf32> -> vector<2x16xf32>
    %249 = arith.addf %247, %248 : vector<2x16xf32>
    %250 = vector.broadcast %231 : vector<1x16xf32> to vector<2x16xf32>
    %251 = arith.addf %249, %250 : vector<2x16xf32>
    %cst_184 = arith.constant dense<0.000000e+00> : vector<2x4xf32>
    %252 = tpu.matmul %251, %234, %cst_184 {dimension_numbers = #tpu.dot_dimension_numbers<[1], [0], [0], [1], [0, 0, 1, 1], [], []>} : vector<2x16xf32>, vector<16x4xf32>, vector<2x4xf32> -> vector<2x4xf32>
    %cst_185 = arith.constant dense<0.000000e+00> : vector<2x16xf32>
    %253 = tpu.matmul %252, %235, %cst_185 {dimension_numbers = #tpu.dot_dimension_numbers<[1], [0], [0], [1], [0, 0, 1, 1], [], []>} : vector<2x4xf32>, vector<4x16xf32>, vector<2x16xf32> -> vector<2x16xf32>
    %254 = arith.subf %251, %253 : vector<2x16xf32>
    %255 = arith.mulf %254, %254 : vector<2x16xf32>
    %cst_186 = arith.constant dense<0.000000e+00> : vector<2x4xf32>
    %256 = tpu.matmul %255, %234, %cst_186 {dimension_numbers = #tpu.dot_dimension_numbers<[1], [0], [0], [1], [0, 0, 1, 1], [], []>} : vector<2x16xf32>, vector<16x4xf32>, vector<2x4xf32> -> vector<2x4xf32>
    %cst_187 = arith.constant 9.99999974E-6 : f32
    %257 = vector.broadcast %cst_187 : f32 to vector<2x4xf32>
    %258 = arith.addf %256, %257 : vector<2x4xf32>
    %259 = math.rsqrt %258 : vector<2x4xf32>
    %cst_188 = arith.constant dense<0.000000e+00> : vector<2x16xf32>
    %260 = tpu.matmul %259, %235, %cst_188 {dimension_numbers = #tpu.dot_dimension_numbers<[1], [0], [0], [1], [0, 0, 1, 1], [], []>} : vector<2x4xf32>, vector<4x16xf32>, vector<2x16xf32> -> vector<2x16xf32>
    %261 = arith.mulf %254, %260 : vector<2x16xf32>
    %262 = vector.broadcast %232 : vector<1x16xf32> to vector<2x16xf32>
    %263 = arith.mulf %261, %262 : vector<2x16xf32>
    %264 = vector.broadcast %233 : vector<1x16xf32> to vector<2x16xf32>
    %265 = arith.addf %263, %264 : vector<2x16xf32>
    %c0_189 = arith.constant 0 : index
    %c0_190 = arith.constant 0 : index
    %266 = vector.load %arg64[%c0_189, %c0_190] : memref<32x16xf32, #tpu.memory_space<vmem>>, vector<32x16xf32>
    %c0_191 = arith.constant 0 : index
    %c0_192 = arith.constant 0 : index
    %267 = vector.load %arg65[%c0_191, %c0_192] : memref<1x16xf32, #tpu.memory_space<vmem>>, vector<1x16xf32>
    %cst_193 = arith.constant dense<0.000000e+00> : vector<2x16xf32>
    %268 = tpu.matmul %60, %266, %cst_193 {dimension_numbers = #tpu.dot_dimension_numbers<[1], [0], [0], [1], [0, 0, 1, 1], [], []>} : vector<2x32xf32>, vector<32x16xf32>, vector<2x16xf32> -> vector<2x16xf32>
    %269 = arith.addf %265, %268 : vector<2x16xf32>
    %270 = vector.broadcast %267 : vector<1x16xf32> to vector<2x16xf32>
    %271 = arith.addf %269, %270 : vector<2x16xf32>
    %cst_194 = arith.constant 1.000000e-10 : f32
    %272 = vector.broadcast %cst_194 : f32 to vector<1x16xf32>
    %273 = arith.addf %45, %272 : vector<1x16xf32>
    %274 = tpu.reciprocal %273 {approx = true} : vector<1x16xf32> -> vector<1x16xf32>
    %275 = vector.broadcast %46 : vector<1x16xf32> to vector<2x16xf32>
    %276 = arith.subf %271, %275 : vector<2x16xf32>
    %277 = vector.broadcast %274 : vector<1x16xf32> to vector<2x16xf32>
    %278 = arith.mulf %276, %277 : vector<2x16xf32>
    %cst_195 = arith.constant 9.99999974E-6 : f32
    %279 = vector.broadcast %cst_195 : f32 to vector<2x4xf32>
    %280 = arith.addf %51, %279 : vector<2x4xf32>
    %281 = math.sqrt %280 : vector<2x4xf32>
    %cst_196 = arith.constant dense<0.000000e+00> : vector<2x16xf32>
    %282 = tpu.matmul %281, %42, %cst_196 {dimension_numbers = #tpu.dot_dimension_numbers<[1], [0], [0], [1], [0, 0, 1, 1], [], []>} : vector<2x4xf32>, vector<4x16xf32>, vector<2x16xf32> -> vector<2x16xf32>
    %283 = arith.mulf %278, %282 : vector<2x16xf32>
    %cst_197 = arith.constant dense<0.000000e+00> : vector<2x16xf32>
    %284 = tpu.matmul %47, %42, %cst_197 {dimension_numbers = #tpu.dot_dimension_numbers<[1], [0], [0], [1], [0, 0, 1, 1], [], []>} : vector<2x4xf32>, vector<4x16xf32>, vector<2x16xf32> -> vector<2x16xf32>
    %285 = arith.addf %283, %284 : vector<2x16xf32>
    %c0_198 = arith.constant 0 : index
    %c0_199 = arith.constant 0 : index
    %286 = vector.load %arg66[%c0_198, %c0_199] : memref<2x16xf32, #tpu.memory_space<vmem>>, vector<2x16xf32>
    tpu.vector_store %arg66[%c0_198, %c0_199], %285 {strides = array<i32>} : memref<2x16xf32, #tpu.memory_space<vmem>>, vector<2x16xf32>,
    return
  }
}

</mosaic_0001>

<llo_original>
// kernel: tpu_custom_call.1
$region0: #{tpu_custom_call.1}
  #allocation0 [shape = 'u32[]', space=smem, size = 0x4, offset = 0x4, fixed_abs, tag = 'smem constant byte address 0x4 - core index']
  #allocation1 [shape = 'u32[72,128]{1,0:T(1,128)}', space=vmem, size = 0x9000, scoped, tag = 'internal scratch']
  %s0 = inlined_call_operand.smem [shape: u32[67], index: -1, kind: input, shape index: {}]
  %s1 = sld [smem:[%s0]]
  %s2 = scalar_lea.smem %s0, 1
  %s3 = sld [smem:[%s2]]
  %s4 = scalar_lea.smem %s0, 2
  %s5 = sld [smem:[%s4]]
  %s6 = scalar_lea.smem %s0, 3
  %s7 = sld [smem:[%s6]]
  %s8 = scalar_lea.smem %s0, 4
  %s9 = sld [smem:[%s8]]
  %s10 = scalar_lea.smem %s0, 5
  %s11 = sld [smem:[%s10]]
  %s12 = scalar_lea.smem %s0, 6
  %s13 = sld [smem:[%s12]]
  %s14 = scalar_lea.smem %s0, 7
  %s15 = sld [smem:[%s14]]
  %s16 = scalar_lea.smem %s0, 8
  %s17 = sld [smem:[%s16]]
  %s18 = scalar_lea.smem %s0, 9
  %s19 = sld [smem:[%s18]]
  %s20 = scalar_lea.smem %s0, 10
  %s21 = sld [smem:[%s20]]
  %s22 = scalar_lea.smem %s0, 11
  %s23 = sld [smem:[%s22]]
  %s24 = scalar_lea.smem %s0, 12
  %s25 = sld [smem:[%s24]]
  %s26 = scalar_lea.smem %s0, 13
  %s27 = sld [smem:[%s26]]
  %s28 = scalar_lea.smem %s0, 14
  %s29 = sld [smem:[%s28]]
  %s30 = scalar_lea.smem %s0, 15
  %s31 = sld [smem:[%s30]]
  %s32 = scalar_lea.smem %s0, 16
  %s33 = sld [smem:[%s32]]
  %s34 = scalar_lea.smem %s0, 17
  %s35 = sld [smem:[%s34]]
  %s36 = scalar_lea.smem %s0, 18
  %s37 = sld [smem:[%s36]]
  %s38 = scalar_lea.smem %s0, 19
  %s39 = sld [smem:[%s38]]
  %s40 = scalar_lea.smem %s0, 20
  %s41 = sld [smem:[%s40]]
  %s42 = scalar_lea.smem %s0, 21
  %s43 = sld [smem:[%s42]]
  %s44 = scalar_lea.smem %s0, 22
  %s45 = sld [smem:[%s44]]
  %s46 = scalar_lea.smem %s0, 23
  %s47 = sld [smem:[%s46]]
  %s48 = scalar_lea.smem %s0, 24
  %s49 = sld [smem:[%s48]]
  %s50 = scalar_lea.smem %s0, 25
  %s51 = sld [smem:[%s50]]
  %s52 = scalar_lea.smem %s0, 26
  %s53 = sld [smem:[%s52]]
  %s54 = scalar_lea.smem %s0, 27
  %s55 = sld [smem:[%s54]]
  %s56 = scalar_lea.smem %s0, 28
  %s57 = sld [smem:[%s56]]
  %s58 = scalar_lea.smem %s0, 29
  %s59 = sld [smem:[%s58]]
  %s60 = scalar_lea.smem %s0, 30
  %s61 = sld [smem:[%s60]]
  %s62 = scalar_lea.smem %s0, 31
  %s63 = sld [smem:[%s62]]
  %s64 = scalar_lea.smem %s0, 32
  %s65 = sld [smem:[%s64]]
  %s66 = scalar_lea.smem %s0, 33
  %s67 = sld [smem:[%s66]]
  %s68 = scalar_lea.smem %s0, 34
  %s69 = sld [smem:[%s68]]
  %s70 = scalar_lea.smem %s0, 35
  %s71 = sld [smem:[%s70]]
  %s72 = scalar_lea.smem %s0, 36
  %s73 = sld [smem:[%s72]]
  %s74 = scalar_lea.smem %s0, 37
  %s75 = sld [smem:[%s74]]
  %s76 = scalar_lea.smem %s0, 38
  %s77 = sld [smem:[%s76]]
  %s78 = scalar_lea.smem %s0, 39
  %s79 = sld [smem:[%s78]]
  %s80 = scalar_lea.smem %s0, 40
  %s81 = sld [smem:[%s80]]
  %s82 = scalar_lea.smem %s0, 41
  %s83 = sld [smem:[%s82]]
  %s84 = scalar_lea.smem %s0, 42
  %s85 = sld [smem:[%s84]]
  %s86 = scalar_lea.smem %s0, 43
  %s87 = sld [smem:[%s86]]
  %s88 = scalar_lea.smem %s0, 44
  %s89 = sld [smem:[%s88]]
  %s90 = scalar_lea.smem %s0, 45
  %s91 = sld [smem:[%s90]]
  %s92 = scalar_lea.smem %s0, 46
  %s93 = sld [smem:[%s92]]
  %s94 = scalar_lea.smem %s0, 47
  %s95 = sld [smem:[%s94]]
  %s96 = scalar_lea.smem %s0, 48
  %s97 = sld [smem:[%s96]]
  %s98 = scalar_lea.smem %s0, 49
  %s99 = sld [smem:[%s98]]
  %s100 = scalar_lea.smem %s0, 50
  %s101 = sld [smem:[%s100]]
  %s102 = scalar_lea.smem %s0, 51
  %s103 = sld [smem:[%s102]]
  %s104 = scalar_lea.smem %s0, 52
  %s105 = sld [smem:[%s104]]
  %s106 = scalar_lea.smem %s0, 53
  %s107 = sld [smem:[%s106]]
  %s108 = scalar_lea.smem %s0, 54
  %s109 = sld [smem:[%s108]]
  %s110 = scalar_lea.smem %s0, 55
  %s111 = sld [smem:[%s110]]
  %s112 = scalar_lea.smem %s0, 56
  %s113 = sld [smem:[%s112]]
  %s114 = scalar_lea.smem %s0, 57
  %s115 = sld [smem:[%s114]]
  %s116 = scalar_lea.smem %s0, 58
  %s117 = sld [smem:[%s116]]
  %s118 = scalar_lea.smem %s0, 59
  %s119 = sld [smem:[%s118]]
  %s120 = scalar_lea.smem %s0, 60
  %s121 = sld [smem:[%s120]]
  %s122 = scalar_lea.smem %s0, 61
  %s123 = sld [smem:[%s122]]
  %s124 = scalar_lea.smem %s0, 62
  %s125 = sld [smem:[%s124]]
  %s126 = scalar_lea.smem %s0, 63
  %s127 = sld [smem:[%s126]]
  %s128 = scalar_lea.smem %s0, 64
  %s129 = sld [smem:[%s128]]
  %s130 = scalar_lea.smem %s0, 65
  %s131 = sld [smem:[%s130]]
  %s132 = scalar_lea.smem %s0, 66
  %s133 = sld [smem:[%s132]]
  %s134 = sld [smem:[#allocation0]]
  $region338: #{tpu_custom_call.1} parent=0
    _
  %s136 = ssub.s32 1, %s134
  %s137 = scalar_select 0, %s136, %s134
  $region1: #{tpu_custom_call.1} parent=0
    #allocation2 [shape = 'u8[512]{0}', space=vmem, size = 0x400, scoped, tag = 'input window, operand 37, single buffered']
    #allocation3 [shape = 's32[1]{0}', space=sflag, size = 0x4, scoped, tag = 'scoped memory for tpu_custom_call.1']
    #allocation4 [shape = 's32[1]{0}', space=sflag, size = 0x4, scoped, tag = 'scoped memory for tpu_custom_call.1']
    #allocation5 [shape = 'u8[512]{0}', space=vmem, size = 0x400, scoped, tag = 'input window, operand 39, single buffered']
    #allocation6 [shape = 's32[1]{0}', space=sflag, size = 0x4, scoped, tag = 'scoped memory for tpu_custom_call.1']
    #allocation7 [shape = 'u8[512]{0}', space=vmem, size = 0x400, scoped, tag = 'input window, operand 41, single buffered']
    #allocation8 [shape = 'u8[512]{0}', space=vmem, size = 0x400, scoped, tag = 'input window, operand 43, single buffered']
    #allocation9 [shape = 's32[1]{0}', space=sflag, size = 0x4, scoped, tag = 'scoped memory for tpu_custom_call.1']
    #allocation10 [shape = 'u8[512]{0}', space=vmem, size = 0x400, scoped, tag = 'input window, operand 44, single buffered']
    #allocation11 [shape = 'u8[512]{0}', space=vmem, size = 0x400, scoped, tag = 'input window, operand 45, single buffered']
    #allocation12 [shape = 's32[1]{0}', space=sflag, size = 0x4, scoped, tag = 'scoped memory for tpu_custom_call.1']
    #allocation13 [shape = 'u8[512]{0}', space=vmem, size = 0x400, scoped, tag = 'input window, operand 47, single buffered']
    #allocation14 [shape = 'u8[512]{0}', space=vmem, size = 0x400, scoped, tag = 'input window, operand 49, single buffered']
    #allocation15 [shape = 's32[1]{0}', space=sflag, size = 0x4, scoped, tag = 'scoped memory for tpu_custom_call.1']
    #allocation16 [shape = 'u8[512]{0}', space=vmem, size = 0x400, scoped, tag = 'input window, operand 50, single buffered']
    #allocation17 [shape = 'u8[512]{0}', space=vmem, size = 0x400, scoped, tag = 'input window, operand 51, single buffered']
    #allocation18 [shape = 's32[1]{0}', space=sflag, size = 0x4, scoped, tag = 'scoped memory for tpu_custom_call.1']
    #allocation19 [shape = 'u8[512]{0}', space=vmem, size = 0x400, scoped, tag = 'input window, operand 54, single buffered']
    #allocation20 [shape = 'u8[512]{0}', space=vmem, size = 0x400, scoped, tag = 'input window, operand 56, single buffered']
    #allocation21 [shape = 's32[1]{0}', space=sflag, size = 0x4, scoped, tag = 'scoped memory for tpu_custom_call.1']
    #allocation22 [shape = 'u8[512]{0}', space=vmem, size = 0x400, scoped, tag = 'input window, operand 59, single buffered']
    #allocation23 [shape = 'u8[512]{0}', space=vmem, size = 0x400, scoped, tag = 'input window, operand 60, single buffered']
    #allocation24 [shape = 's32[1]{0}', space=sflag, size = 0x4, scoped, tag = 'scoped memory for tpu_custom_call.1']
    #allocation25 [shape = 'u8[512]{0}', space=vmem, size = 0x400, scoped, tag = 'input window, operand 61, single buffered']
    #allocation26 [shape = 'u8[512]{0}', space=vmem, size = 0x400, scoped, tag = 'input window, operand 65, single buffered']
    #allocation27 [shape = 's32[1]{0}', space=sflag, size = 0x4, scoped, tag = 'scoped memory for tpu_custom_call.1']
    #allocation28 [shape = 'u8[1024]{0}', space=vmem, size = 0x400, scoped, tag = 'output window, operand 0, single buffered']
    %138 = vsyncpa [#allocation3], 0
    %139 = vsyncpa [#allocation6], 0
    %140 = vsyncpa [#allocation9], 0
    %141 = vsyncpa [#allocation12], 0
    %142 = vsyncpa [#allocation15], 0
    %143 = vsyncpa [#allocation18], 0
    %144 = vsyncpa [#allocation21], 0
    %145 = vsyncpa [#allocation24], 0
    %146 = vsyncpa [#allocation27], 0
    %147 = vsyncpa [#allocation4], 0
    // Predicated region
    $region2: #{tpu_custom_call.1} parent=1 // pred_check
      _
    $region3: #{tpu_custom_call.1} parent=1 // pred_check_branch
      %149 = sbr.rel (0) target = $region5
    $region4: #{tpu_custom_call.1} parent=1 // pred_region
      _
    $region5: #{tpu_custom_call.1} parent=1 // pred_fallthru
      _
    // Predicated region
    $region6: #{tpu_custom_call.1} parent=1 // pred_check
      _
    $region7: #{tpu_custom_call.1} parent=1 // pred_check_branch
      %151 = sbr.rel (0) target = $region9
    $region8: #{tpu_custom_call.1} parent=1 // pred_region
      _
    $region9: #{tpu_custom_call.1} parent=1 // pred_fallthru
      _
    // Predicated region
    $region10: #{tpu_custom_call.1} parent=1 // pred_check
      _
    $region11: #{tpu_custom_call.1} parent=1 // pred_check_branch
      %153 = sbr.rel (0) target = $region13
    $region12: #{tpu_custom_call.1} parent=1 // pred_region
      _
    $region13: #{tpu_custom_call.1} parent=1 // pred_fallthru
      _
    // Predicated region
    $region14: #{tpu_custom_call.1} parent=1 // pred_check
      _
    $region15: #{tpu_custom_call.1} parent=1 // pred_check_branch
      %155 = sbr.rel (0) target = $region17
    $region16: #{tpu_custom_call.1} parent=1 // pred_region
      _
    $region17: #{tpu_custom_call.1} parent=1 // pred_fallthru
      _
    // Predicated region
    $region18: #{tpu_custom_call.1} parent=1 // pred_check
      _
    $region19: #{tpu_custom_call.1} parent=1 // pred_check_branch
      %157 = sbr.rel (0) target = $region21
    $region20: #{tpu_custom_call.1} parent=1 // pred_region
      _
    $region21: #{tpu_custom_call.1} parent=1 // pred_fallthru
      _
    // Predicated region
    $region22: #{tpu_custom_call.1} parent=1 // pred_check
      _
    $region23: #{tpu_custom_call.1} parent=1 // pred_check_branch
      %159 = sbr.rel (0) target = $region25
    $region24: #{tpu_custom_call.1} parent=1 // pred_region
      _
    $region25: #{tpu_custom_call.1} parent=1 // pred_fallthru
      _
    // Predicated region
    $region26: #{tpu_custom_call.1} parent=1 // pred_check
      _
    $region27: #{tpu_custom_call.1} parent=1 // pred_check_branch
      %161 = sbr.rel (0) target = $region29
    $region28: #{tpu_custom_call.1} parent=1 // pred_region
      _
    $region29: #{tpu_custom_call.1} parent=1 // pred_fallthru
      _
    // Predicated region
    $region30: #{tpu_custom_call.1} parent=1 // pred_check
      _
    $region31: #{tpu_custom_call.1} parent=1 // pred_check_branch
      %163 = sbr.rel (0) target = $region33
    $region32: #{tpu_custom_call.1} parent=1 // pred_region
      _
    $region33: #{tpu_custom_call.1} parent=1 // pred_fallthru
      _
    // Predicated region
    $region34: #{tpu_custom_call.1} parent=1 // pred_check
      _
    $region35: #{tpu_custom_call.1} parent=1 // pred_check_branch
      %165 = sbr.rel (0) target = $region37
    $region36: #{tpu_custom_call.1} parent=1 // pred_region
      _
    $region37: #{tpu_custom_call.1} parent=1 // pred_fallthru
      _
    // Predicated region
    $region38: #{tpu_custom_call.1} parent=1 // pred_check
      _
    $region39: #{tpu_custom_call.1} parent=1 // pred_check_branch
      %167 = sbr.rel (0) target = $region41
    $region40: #{tpu_custom_call.1} parent=1 // pred_region
      _
    $region41: #{tpu_custom_call.1} parent=1 // pred_fallthru
      _
    // Predicated region
    $region42: #{tpu_custom_call.1} parent=1 // pred_check
      _
    $region43: #{tpu_custom_call.1} parent=1 // pred_check_branch
      %169 = sbr.rel (0) target = $region45
    $region44: #{tpu_custom_call.1} parent=1 // pred_region
      _
    $region45: #{tpu_custom_call.1} parent=1 // pred_fallthru
      _
    // Predicated region
    $region46: #{tpu_custom_call.1} parent=1 // pred_check
      _
    $region47: #{tpu_custom_call.1} parent=1 // pred_check_branch
      %171 = sbr.rel (0) target = $region49
    $region48: #{tpu_custom_call.1} parent=1 // pred_region
      _
    $region49: #{tpu_custom_call.1} parent=1 // pred_fallthru
      _
    // Predicated region
    $region50: #{tpu_custom_call.1} parent=1 // pred_check
      _
    $region51: #{tpu_custom_call.1} parent=1 // pred_check_branch
      %173 = sbr.rel (0) target = $region53
    $region52: #{tpu_custom_call.1} parent=1 // pred_region
      _
    $region53: #{tpu_custom_call.1} parent=1 // pred_fallthru
      _
    // Predicated region
    $region54: #{tpu_custom_call.1} parent=1 // pred_check
      _
    $region55: #{tpu_custom_call.1} parent=1 // pred_check_branch
      %175 = sbr.rel (0) target = $region57
    $region56: #{tpu_custom_call.1} parent=1 // pred_region
      _
    $region57: #{tpu_custom_call.1} parent=1 // pred_fallthru
      _
    // Predicated region
    $region58: #{tpu_custom_call.1} parent=1 // pred_check
      _
    $region59: #{tpu_custom_call.1} parent=1 // pred_check_branch
      %177 = sbr.rel (0) target = $region61
    $region60: #{tpu_custom_call.1} parent=1 // pred_region
      _
    $region61: #{tpu_custom_call.1} parent=1 // pred_fallthru
      _
    // Predicated region
    $region62: #{tpu_custom_call.1} parent=1 // pred_check
      _
    $region63: #{tpu_custom_call.1} parent=1 // pred_check_branch
      %179 = sbr.rel (0) target = $region65
    $region64: #{tpu_custom_call.1} parent=1 // pred_region
      _
    $region65: #{tpu_custom_call.1} parent=1 // pred_fallthru
      _
    // Predicated region
    $region66: #{tpu_custom_call.1} parent=1 // pred_check
      _
    $region67: #{tpu_custom_call.1} parent=1 // pred_check_branch
      %181 = sbr.rel (0) target = $region69
    $region68: #{tpu_custom_call.1} parent=1 // pred_region
      _
    $region69: #{tpu_custom_call.1} parent=1 // pred_fallthru
      _
    // Predicated region
    $region70: #{tpu_custom_call.1} parent=1 // pred_check
      _
    $region71: #{tpu_custom_call.1} parent=1 // pred_check_branch
      %183 = sbr.rel (0) target = $region73
    $region72: #{tpu_custom_call.1} parent=1 // pred_region
      _
    $region73: #{tpu_custom_call.1} parent=1 // pred_fallthru
      _
    // Predicated region
    $region74: #{tpu_custom_call.1} parent=1 // pred_check
      _
    $region75: #{tpu_custom_call.1} parent=1 // pred_check_branch
      %185 = sbr.rel (0) target = $region77
    $region76: #{tpu_custom_call.1} parent=1 // pred_region
      _
    $region77: #{tpu_custom_call.1} parent=1 // pred_fallthru
      _
    // Predicated region
    $region78: #{tpu_custom_call.1} parent=1 // pred_check
      _
    $region79: #{tpu_custom_call.1} parent=1 // pred_check_branch
      %187 = sbr.rel (0) target = $region81
    $region80: #{tpu_custom_call.1} parent=1 // pred_region
      _
    $region81: #{tpu_custom_call.1} parent=1 // pred_fallthru
      _
    // Predicated region
    $region82: #{tpu_custom_call.1} parent=1 // pred_check
      _
    $region83: #{tpu_custom_call.1} parent=1 // pred_check_branch
      %189 = sbr.rel (0) target = $region85
    $region84: #{tpu_custom_call.1} parent=1 // pred_region
      _
    $region85: #{tpu_custom_call.1} parent=1 // pred_fallthru
      _
    // Predicated region
    $region86: #{tpu_custom_call.1} parent=1 // pred_check
      _
    $region87: #{tpu_custom_call.1} parent=1 // pred_check_branch
      %191 = sbr.rel (0) target = $region89
    $region88: #{tpu_custom_call.1} parent=1 // pred_region
      _
    $region89: #{tpu_custom_call.1} parent=1 // pred_fallthru
      _
    // Predicated region
    $region90: #{tpu_custom_call.1} parent=1 // pred_check
      _
    $region91: #{tpu_custom_call.1} parent=1 // pred_check_branch
      %193 = sbr.rel (0) target = $region93
    $region92: #{tpu_custom_call.1} parent=1 // pred_region
      _
    $region93: #{tpu_custom_call.1} parent=1 // pred_fallthru
      _
    // Predicated region
    $region94: #{tpu_custom_call.1} parent=1 // pred_check
      _
    $region95: #{tpu_custom_call.1} parent=1 // pred_check_branch
      %195 = sbr.rel (0) target = $region97
    $region96: #{tpu_custom_call.1} parent=1 // pred_region
      _
    $region97: #{tpu_custom_call.1} parent=1 // pred_fallthru
      _
    // Predicated region
    $region98: #{tpu_custom_call.1} parent=1 // pred_check
      _
    $region99: #{tpu_custom_call.1} parent=1 // pred_check_branch
      %197 = sbr.rel (0) target = $region101
    $region100: #{tpu_custom_call.1} parent=1 // pred_region
      _
    $region101: #{tpu_custom_call.1} parent=1 // pred_fallthru
      _
    // Predicated region
    $region102: #{tpu_custom_call.1} parent=1 // pred_check
      _
    $region103: #{tpu_custom_call.1} parent=1 // pred_check_branch
      %199 = sbr.rel (0) target = $region105
    $region104: #{tpu_custom_call.1} parent=1 // pred_region
      _
    $region105: #{tpu_custom_call.1} parent=1 // pred_fallthru
      _
    // Predicated region
    $region106: #{tpu_custom_call.1} parent=1 // pred_check
      _
    $region107: #{tpu_custom_call.1} parent=1 // pred_check_branch
      %201 = sbr.rel (0) target = $region109
    $region108: #{tpu_custom_call.1} parent=1 // pred_region
      _
    $region109: #{tpu_custom_call.1} parent=1 // pred_fallthru
      _
    // Predicated region
    $region110: #{tpu_custom_call.1} parent=1 // pred_check
      _
    $region111: #{tpu_custom_call.1} parent=1 // pred_check_branch
      %203 = sbr.rel (0) target = $region113
    $region112: #{tpu_custom_call.1} parent=1 // pred_region
      _
    $region113: #{tpu_custom_call.1} parent=1 // pred_fallthru
      _
    // Predicated region
    $region114: #{tpu_custom_call.1} parent=1 // pred_check
      _
    $region115: #{tpu_custom_call.1} parent=1 // pred_check_branch
      %205 = sbr.rel (0) target = $region117
    $region116: #{tpu_custom_call.1} parent=1 // pred_region
      _
    $region117: #{tpu_custom_call.1} parent=1 // pred_fallthru
      _
    // Predicated region
    $region118: #{tpu_custom_call.1} parent=1 // pred_check
      _
    $region119: #{tpu_custom_call.1} parent=1 // pred_check_branch
      %207 = sbr.rel (0) target = $region121
    $region120: #{tpu_custom_call.1} parent=1 // pred_region
      _
    $region121: #{tpu_custom_call.1} parent=1 // pred_fallthru
      _
    // Predicated region
    $region122: #{tpu_custom_call.1} parent=1 // pred_check
      _
    $region123: #{tpu_custom_call.1} parent=1 // pred_check_branch
      %209 = sbr.rel (0) target = $region125
    $region124: #{tpu_custom_call.1} parent=1 // pred_region
      _
    $region125: #{tpu_custom_call.1} parent=1 // pred_fallthru
      _
    // Predicated region
    $region126: #{tpu_custom_call.1} parent=1 // pred_check
      _
    $region127: #{tpu_custom_call.1} parent=1 // pred_check_branch
      %211 = sbr.rel (0) target = $region129
    $region128: #{tpu_custom_call.1} parent=1 // pred_region
      _
    $region129: #{tpu_custom_call.1} parent=1 // pred_fallthru
      _
    // Predicated region
    $region130: #{tpu_custom_call.1} parent=1 // pred_check
      _
    $region131: #{tpu_custom_call.1} parent=1 // pred_check_branch
      %213 = sbr.rel (0) target = $region133
    $region132: #{tpu_custom_call.1} parent=1 // pred_region
      _
    $region133: #{tpu_custom_call.1} parent=1 // pred_fallthru
      _
    // Predicated region
    $region134: #{tpu_custom_call.1} parent=1 // pred_check
      _
    $region135: #{tpu_custom_call.1} parent=1 // pred_check_branch
      %215 = sbr.rel (0) target = $region137
    $region136: #{tpu_custom_call.1} parent=1 // pred_region
      _
    $region137: #{tpu_custom_call.1} parent=1 // pred_fallthru
      _
    // Predicated region
    $region138: #{tpu_custom_call.1} parent=1 // pred_check
      _
    $region139: #{tpu_custom_call.1} parent=1 // pred_check_branch
      %217 = sbr.rel (0) target = $region141
    $region140: #{tpu_custom_call.1} parent=1 // pred_region
      _
    $region141: #{tpu_custom_call.1} parent=1 // pred_fallthru
      _
    // Predicated region
    $region142: #{tpu_custom_call.1} parent=1 // pred_check
      _
    $region143: #{tpu_custom_call.1} parent=1 // pred_check_branch
      %219 = sbr.rel (0) target = $region145
    $region144: #{tpu_custom_call.1} parent=1 // pred_region
      _
    $region145: #{tpu_custom_call.1} parent=1 // pred_fallthru
      _
    // Predicated region
    $region146: #{tpu_custom_call.1} parent=1 // pred_check
      _
    $region147: #{tpu_custom_call.1} parent=1 // pred_check_branch
      %221 = sbr.rel (0) target = $region149
    $region148: #{tpu_custom_call.1} parent=1 // pred_region
      _
    $region149: #{tpu_custom_call.1} parent=1 // pred_fallthru
      _
    // Predicated region
    $region150: #{tpu_custom_call.1} parent=1 // pred_check
      _
    $region151: #{tpu_custom_call.1} parent=1 // pred_check_branch
      %223 = sbr.rel (0) target = $region153
    $region152: #{tpu_custom_call.1} parent=1 // pred_region
      %225 = vsyncadd [#allocation3], 0
      %s227 = sshll.u32 %s75, 4
      %s228 = int_to_ptr.hbm [resolvable:$true] %s227
      %s229 = sshll.u32 [#allocation2], 4
      %s230 = int_to_ptr.vmem [resolvable:$true] %s229
      %232 = dma.hbm_to_vmem [thread:$0]  %s228, 16, %s230, [#allocation3]
    $region153: #{tpu_custom_call.1} parent=1 // pred_fallthru
      _
    // Predicated region
    $region154: #{tpu_custom_call.1} parent=1 // pred_check
      _
    $region155: #{tpu_custom_call.1} parent=1 // pred_check_branch
      %234 = sbr.rel (0) target = $region157
    $region156: #{tpu_custom_call.1} parent=1 // pred_region
      _
    $region157: #{tpu_custom_call.1} parent=1 // pred_fallthru
      _
    // Predicated region
    $region158: #{tpu_custom_call.1} parent=1 // pred_check
      _
    $region159: #{tpu_custom_call.1} parent=1 // pred_check_branch
      %236 = sbr.rel (0) target = $region161
    $region160: #{tpu_custom_call.1} parent=1 // pred_region
      %238 = vsyncadd [#allocation6], 0
      %s240 = sshll.u32 %s79, 4
      %s241 = int_to_ptr.hbm [resolvable:$true] %s240
      %s242 = sshll.u32 [#allocation5], 4
      %s243 = int_to_ptr.vmem [resolvable:$true] %s242
      %245 = dma.hbm_to_vmem [thread:$0]  %s241, 16, %s243, [#allocation6]
    $region161: #{tpu_custom_call.1} parent=1 // pred_fallthru
      _
    // Predicated region
    $region162: #{tpu_custom_call.1} parent=1 // pred_check
      _
    $region163: #{tpu_custom_call.1} parent=1 // pred_check_branch
      %247 = sbr.rel (0) target = $region165
    $region164: #{tpu_custom_call.1} parent=1 // pred_region
      _
    $region165: #{tpu_custom_call.1} parent=1 // pred_fallthru
      _
    // Predicated region
    $region166: #{tpu_custom_call.1} parent=1 // pred_check
      _
    $region167: #{tpu_custom_call.1} parent=1 // pred_check_branch
      %249 = sbr.rel (0) target = $region169
    $region168: #{tpu_custom_call.1} parent=1 // pred_region
      %251 = vsyncadd [#allocation6], 0
      %s253 = sshll.u32 %s83, 4
      %s254 = int_to_ptr.hbm [resolvable:$true] %s253
      %s255 = sshll.u32 [#allocation7], 4
      %s256 = int_to_ptr.vmem [resolvable:$true] %s255
      %258 = dma.hbm_to_vmem [thread:$0]  %s254, 16, %s256, [#allocation6]
    $region169: #{tpu_custom_call.1} parent=1 // pred_fallthru
      _
    // Predicated region
    $region170: #{tpu_custom_call.1} parent=1 // pred_check
      _
    $region171: #{tpu_custom_call.1} parent=1 // pred_check_branch
      %260 = sbr.rel (0) target = $region173
    $region172: #{tpu_custom_call.1} parent=1 // pred_region
      _
    $region173: #{tpu_custom_call.1} parent=1 // pred_fallthru
      _
    // Predicated region
    $region174: #{tpu_custom_call.1} parent=1 // pred_check
      _
    $region175: #{tpu_custom_call.1} parent=1 // pred_check_branch
      %262 = sbr.rel (0) target = $region177
    $region176: #{tpu_custom_call.1} parent=1 // pred_region
      %264 = vsyncadd [#allocation9], 0
      %s266 = sshll.u32 %s87, 4
      %s267 = int_to_ptr.hbm [resolvable:$true] %s266
      %s268 = sshll.u32 [#allocation8], 4
      %s269 = int_to_ptr.vmem [resolvable:$true] %s268
      %271 = dma.hbm_to_vmem [thread:$0]  %s267, 16, %s269, [#allocation9]
    $region177: #{tpu_custom_call.1} parent=1 // pred_fallthru
      _
    // Predicated region
    $region178: #{tpu_custom_call.1} parent=1 // pred_check
      _
    $region179: #{tpu_custom_call.1} parent=1 // pred_check_branch
      %273 = sbr.rel (0) target = $region181
    $region180: #{tpu_custom_call.1} parent=1 // pred_region
      %275 = vsyncadd [#allocation9], 0
      %s277 = sshll.u32 %s89, 4
      %s278 = int_to_ptr.hbm [resolvable:$true] %s277
      %s279 = sshll.u32 [#allocation10], 4
      %s280 = int_to_ptr.vmem [resolvable:$true] %s279
      %282 = dma.hbm_to_vmem [thread:$0]  %s278, 16, %s280, [#allocation9]
    $region181: #{tpu_custom_call.1} parent=1 // pred_fallthru
      _
    // Predicated region
    $region182: #{tpu_custom_call.1} parent=1 // pred_check
      _
    $region183: #{tpu_custom_call.1} parent=1 // pred_check_branch
      %284 = sbr.rel (0) target = $region185
    $region184: #{tpu_custom_call.1} parent=1 // pred_region
      %286 = vsyncadd [#allocation12], 0
      %s288 = sshll.u32 %s91, 4
      %s289 = int_to_ptr.hbm [resolvable:$true] %s288
      %s290 = sshll.u32 [#allocation11], 4
      %s291 = int_to_ptr.vmem [resolvable:$true] %s290
      %293 = dma.hbm_to_vmem [thread:$0]  %s289, 16, %s291, [#allocation12]
    $region185: #{tpu_custom_call.1} parent=1 // pred_fallthru
      _
    // Predicated region
    $region186: #{tpu_custom_call.1} parent=1 // pred_check
      _
    $region187: #{tpu_custom_call.1} parent=1 // pred_check_branch
      %295 = sbr.rel (0) target = $region189
    $region188: #{tpu_custom_call.1} parent=1 // pred_region
      _
    $region189: #{tpu_custom_call.1} parent=1 // pred_fallthru
      _
    // Predicated region
    $region190: #{tpu_custom_call.1} parent=1 // pred_check
      _
    $region191: #{tpu_custom_call.1} parent=1 // pred_check_branch
      %297 = sbr.rel (0) target = $region193
    $region192: #{tpu_custom_call.1} parent=1 // pred_region
      %299 = vsyncadd [#allocation12], 0
      %s301 = sshll.u32 %s95, 4
      %s302 = int_to_ptr.hbm [resolvable:$true] %s301
      %s303 = sshll.u32 [#allocation13], 4
      %s304 = int_to_ptr.vmem [resolvable:$true] %s303
      %306 = dma.hbm_to_vmem [thread:$0]  %s302, 16, %s304, [#allocation12]
    $region193: #{tpu_custom_call.1} parent=1 // pred_fallthru
      _
    // Predicated region
    $region194: #{tpu_custom_call.1} parent=1 // pred_check
      _
    $region195: #{tpu_custom_call.1} parent=1 // pred_check_branch
      %308 = sbr.rel (0) target = $region197
    $region196: #{tpu_custom_call.1} parent=1 // pred_region
      _
    $region197: #{tpu_custom_call.1} parent=1 // pred_fallthru
      _
    // Predicated region
    $region198: #{tpu_custom_call.1} parent=1 // pred_check
      _
    $region199: #{tpu_custom_call.1} parent=1 // pred_check_branch
      %310 = sbr.rel (0) target = $region201
    $region200: #{tpu_custom_call.1} parent=1 // pred_region
      %312 = vsyncadd [#allocation15], 0
      %s314 = sshll.u32 %s99, 4
      %s315 = int_to_ptr.hbm [resolvable:$true] %s314
      %s316 = sshll.u32 [#allocation14], 4
      %s317 = int_to_ptr.vmem [resolvable:$true] %s316
      %319 = dma.hbm_to_vmem [thread:$0]  %s315, 16, %s317, [#allocation15]
    $region201: #{tpu_custom_call.1} parent=1 // pred_fallthru
      _
    // Predicated region
    $region202: #{tpu_custom_call.1} parent=1 // pred_check
      _
    $region203: #{tpu_custom_call.1} parent=1 // pred_check_branch
      %321 = sbr.rel (0) target = $region205
    $region204: #{tpu_custom_call.1} parent=1 // pred_region
      %323 = vsyncadd [#allocation15], 0
      %s325 = sshll.u32 %s101, 4
      %s326 = int_to_ptr.hbm [resolvable:$true] %s325
      %s327 = sshll.u32 [#allocation16], 4
      %s328 = int_to_ptr.vmem [resolvable:$true] %s327
      %330 = dma.hbm_to_vmem [thread:$0]  %s326, 16, %s328, [#allocation15]
    $region205: #{tpu_custom_call.1} parent=1 // pred_fallthru
      _
    // Predicated region
    $region206: #{tpu_custom_call.1} parent=1 // pred_check
      _
    $region207: #{tpu_custom_call.1} parent=1 // pred_check_branch
      %332 = sbr.rel (0) target = $region209
    $region208: #{tpu_custom_call.1} parent=1 // pred_region
      %334 = vsyncadd [#allocation18], 0
      %s336 = sshll.u32 %s103, 4
      %s337 = int_to_ptr.hbm [resolvable:$true] %s336
      %s338 = sshll.u32 [#allocation17], 4
      %s339 = int_to_ptr.vmem [resolvable:$true] %s338
      %341 = dma.hbm_to_vmem [thread:$0]  %s337, 16, %s339, [#allocation18]
    $region209: #{tpu_custom_call.1} parent=1 // pred_fallthru
      _
    // Predicated region
    $region210: #{tpu_custom_call.1} parent=1 // pred_check
      _
    $region211: #{tpu_custom_call.1} parent=1 // pred_check_branch
      %343 = sbr.rel (0) target = $region213
    $region212: #{tpu_custom_call.1} parent=1 // pred_region
      _
    $region213: #{tpu_custom_call.1} parent=1 // pred_fallthru
      _
    // Predicated region
    $region214: #{tpu_custom_call.1} parent=1 // pred_check
      _
    $region215: #{tpu_custom_call.1} parent=1 // pred_check_branch
      %345 = sbr.rel (0) target = $region217
    $region216: #{tpu_custom_call.1} parent=1 // pred_region
      _
    $region217: #{tpu_custom_call.1} parent=1 // pred_fallthru
      _
    // Predicated region
    $region218: #{tpu_custom_call.1} parent=1 // pred_check
      _
    $region219: #{tpu_custom_call.1} parent=1 // pred_check_branch
      %347 = sbr.rel (0) target = $region221
    $region220: #{tpu_custom_call.1} parent=1 // pred_region
      %349 = vsyncadd [#allocation18], 0
      %s351 = sshll.u32 %s109, 4
      %s352 = int_to_ptr.hbm [resolvable:$true] %s351
      %s353 = sshll.u32 [#allocation19], 4
      %s354 = int_to_ptr.vmem [resolvable:$true] %s353
      %356 = dma.hbm_to_vmem [thread:$0]  %s352, 16, %s354, [#allocation18]
    $region221: #{tpu_custom_call.1} parent=1 // pred_fallthru
      _
    // Predicated region
    $region222: #{tpu_custom_call.1} parent=1 // pred_check
      _
    $region223: #{tpu_custom_call.1} parent=1 // pred_check_branch
      %358 = sbr.rel (0) target = $region225
    $region224: #{tpu_custom_call.1} parent=1 // pred_region
      _
    $region225: #{tpu_custom_call.1} parent=1 // pred_fallthru
      _
    // Predicated region
    $region226: #{tpu_custom_call.1} parent=1 // pred_check
      _
    $region227: #{tpu_custom_call.1} parent=1 // pred_check_branch
      %360 = sbr.rel (0) target = $region229
    $region228: #{tpu_custom_call.1} parent=1 // pred_region
      %362 = vsyncadd [#allocation21], 0
      %s364 = sshll.u32 %s113, 4
      %s365 = int_to_ptr.hbm [resolvable:$true] %s364
      %s366 = sshll.u32 [#allocation20], 4
      %s367 = int_to_ptr.vmem [resolvable:$true] %s366
      %369 = dma.hbm_to_vmem [thread:$0]  %s365, 16, %s367, [#allocation21]
    $region229: #{tpu_custom_call.1} parent=1 // pred_fallthru
      _
    // Predicated region
    $region230: #{tpu_custom_call.1} parent=1 // pred_check
      _
    $region231: #{tpu_custom_call.1} parent=1 // pred_check_branch
      %371 = sbr.rel (0) target = $region233
    $region232: #{tpu_custom_call.1} parent=1 // pred_region
      _
    $region233: #{tpu_custom_call.1} parent=1 // pred_fallthru
      _
    // Predicated region
    $region234: #{tpu_custom_call.1} parent=1 // pred_check
      _
    $region235: #{tpu_custom_call.1} parent=1 // pred_check_branch
      %373 = sbr.rel (0) target = $region237
    $region236: #{tpu_custom_call.1} parent=1 // pred_region
      _
    $region237: #{tpu_custom_call.1} parent=1 // pred_fallthru
      _
    // Predicated region
    $region238: #{tpu_custom_call.1} parent=1 // pred_check
      _
    $region239: #{tpu_custom_call.1} parent=1 // pred_check_branch
      %375 = sbr.rel (0) target = $region241
    $region240: #{tpu_custom_call.1} parent=1 // pred_region
      %377 = vsyncadd [#allocation21], 0
      %s379 = sshll.u32 %s119, 4
      %s380 = int_to_ptr.hbm [resolvable:$true] %s379
      %s381 = sshll.u32 [#allocation22], 4
      %s382 = int_to_ptr.vmem [resolvable:$true] %s381
      %384 = dma.hbm_to_vmem [thread:$0]  %s380, 16, %s382, [#allocation21]
    $region241: #{tpu_custom_call.1} parent=1 // pred_fallthru
      _
    // Predicated region
    $region242: #{tpu_custom_call.1} parent=1 // pred_check
      _
    $region243: #{tpu_custom_call.1} parent=1 // pred_check_branch
      %386 = sbr.rel (0) target = $region245
    $region244: #{tpu_custom_call.1} parent=1 // pred_region
      %388 = vsyncadd [#allocation24], 0
      %s390 = sshll.u32 %s121, 4
      %s391 = int_to_ptr.hbm [resolvable:$true] %s390
      %s392 = sshll.u32 [#allocation23], 4
      %s393 = int_to_ptr.vmem [resolvable:$true] %s392
      %395 = dma.hbm_to_vmem [thread:$0]  %s391, 16, %s393, [#allocation24]
    $region245: #{tpu_custom_call.1} parent=1 // pred_fallthru
      _
    // Predicated region
    $region246: #{tpu_custom_call.1} parent=1 // pred_check
      _
    $region247: #{tpu_custom_call.1} parent=1 // pred_check_branch
      %397 = sbr.rel (0) target = $region249
    $region248: #{tpu_custom_call.1} parent=1 // pred_region
      %399 = vsyncadd [#allocation24], 0
      %s401 = sshll.u32 %s123, 4
      %s402 = int_to_ptr.hbm [resolvable:$true] %s401
      %s403 = sshll.u32 [#allocation25], 4
      %s404 = int_to_ptr.vmem [resolvable:$true] %s403
      %406 = dma.hbm_to_vmem [thread:$0]  %s402, 16, %s404, [#allocation24]
    $region249: #{tpu_custom_call.1} parent=1 // pred_fallthru
      _
    // Predicated region
    $region250: #{tpu_custom_call.1} parent=1 // pred_check
      _
    $region251: #{tpu_custom_call.1} parent=1 // pred_check_branch
      %408 = sbr.rel (0) target = $region253
    $region252: #{tpu_custom_call.1} parent=1 // pred_region
      _
    $region253: #{tpu_custom_call.1} parent=1 // pred_fallthru
      _
    // Predicated region
    $region254: #{tpu_custom_call.1} parent=1 // pred_check
      _
    $region255: #{tpu_custom_call.1} parent=1 // pred_check_branch
      %410 = sbr.rel (0) target = $region257
    $region256: #{tpu_custom_call.1} parent=1 // pred_region
      _
    $region257: #{tpu_custom_call.1} parent=1 // pred_fallthru
      _
    // Predicated region
    $region258: #{tpu_custom_call.1} parent=1 // pred_check
      _
    $region259: #{tpu_custom_call.1} parent=1 // pred_check_branch
      %412 = sbr.rel (0) target = $region261
    $region260: #{tpu_custom_call.1} parent=1 // pred_region
      _
    $region261: #{tpu_custom_call.1} parent=1 // pred_fallthru
      _
    // Predicated region
    $region262: #{tpu_custom_call.1} parent=1 // pred_check
      _
    $region263: #{tpu_custom_call.1} parent=1 // pred_check_branch
      %414 = sbr.rel (0) target = $region265
    $region264: #{tpu_custom_call.1} parent=1 // pred_region
      %416 = vsyncadd [#allocation27], 0
      %s418 = sshll.u32 %s131, 4
      %s419 = int_to_ptr.hbm [resolvable:$true] %s418
      %s420 = sshll.u32 [#allocation26], 4
      %s421 = int_to_ptr.vmem [resolvable:$true] %s420
      %423 = dma.hbm_to_vmem [thread:$0]  %s419, 16, %s421, [#allocation27]
    $region265: #{tpu_custom_call.1} parent=1 // pred_fallthru
      _
    // Predicated region
    $region266: #{tpu_custom_call.1} parent=1 // pred_check
      _
    $region267: #{tpu_custom_call.1} parent=1 // pred_check_branch
      %425 = sbr.rel (0) target = $region269
    $region268: #{tpu_custom_call.1} parent=1 // pred_region
      %427 = dma.done [#allocation3], 16
    $region269: #{tpu_custom_call.1} parent=1 // pred_fallthru
      _
    // Predicated region
    $region270: #{tpu_custom_call.1} parent=1 // pred_check
      _
    $region271: #{tpu_custom_call.1} parent=1 // pred_check_branch
      %429 = sbr.rel (0) target = $region273
    $region272: #{tpu_custom_call.1} parent=1 // pred_region
      %431 = dma.done [#allocation6], 16
    $region273: #{tpu_custom_call.1} parent=1 // pred_fallthru
      _
    // Predicated region
    $region274: #{tpu_custom_call.1} parent=1 // pred_check
      _
    $region275: #{tpu_custom_call.1} parent=1 // pred_check_branch
      %433 = sbr.rel (0) target = $region277
    $region276: #{tpu_custom_call.1} parent=1 // pred_region
      %435 = dma.done [#allocation6], 16
    $region277: #{tpu_custom_call.1} parent=1 // pred_fallthru
      _
    // Predicated region
    $region278: #{tpu_custom_call.1} parent=1 // pred_check
      _
    $region279: #{tpu_custom_call.1} parent=1 // pred_check_branch
      %437 = sbr.rel (0) target = $region281
    $region280: #{tpu_custom_call.1} parent=1 // pred_region
      %439 = dma.done [#allocation9], 16
    $region281: #{tpu_custom_call.1} parent=1 // pred_fallthru
      _
    // Predicated region
    $region282: #{tpu_custom_call.1} parent=1 // pred_check
      _
    $region283: #{tpu_custom_call.1} parent=1 // pred_check_branch
      %441 = sbr.rel (0) target = $region285
    $region284: #{tpu_custom_call.1} parent=1 // pred_region
      %443 = dma.done [#allocation9], 16
    $region285: #{tpu_custom_call.1} parent=1 // pred_fallthru
      _
    // Predicated region
    $region286: #{tpu_custom_call.1} parent=1 // pred_check
      _
    $region287: #{tpu_custom_call.1} parent=1 // pred_check_branch
      %445 = sbr.rel (0) target = $region289
    $region288: #{tpu_custom_call.1} parent=1 // pred_region
      %447 = dma.done [#allocation12], 16
    $region289: #{tpu_custom_call.1} parent=1 // pred_fallthru
      _
    // Predicated region
    $region290: #{tpu_custom_call.1} parent=1 // pred_check
      _
    $region291: #{tpu_custom_call.1} parent=1 // pred_check_branch
      %449 = sbr.rel (0) target = $region293
    $region292: #{tpu_custom_call.1} parent=1 // pred_region
      %451 = dma.done [#allocation12], 16
    $region293: #{tpu_custom_call.1} parent=1 // pred_fallthru
      _
    // Predicated region
    $region294: #{tpu_custom_call.1} parent=1 // pred_check
      _
    $region295: #{tpu_custom_call.1} parent=1 // pred_check_branch
      %453 = sbr.rel (0) target = $region297
    $region296: #{tpu_custom_call.1} parent=1 // pred_region
      %455 = dma.done [#allocation15], 16
    $region297: #{tpu_custom_call.1} parent=1 // pred_fallthru
      _
    // Predicated region
    $region298: #{tpu_custom_call.1} parent=1 // pred_check
      _
    $region299: #{tpu_custom_call.1} parent=1 // pred_check_branch
      %457 = sbr.rel (0) target = $region301
    $region300: #{tpu_custom_call.1} parent=1 // pred_region
      %459 = dma.done [#allocation15], 16
    $region301: #{tpu_custom_call.1} parent=1 // pred_fallthru
      _
    // Predicated region
    $region302: #{tpu_custom_call.1} parent=1 // pred_check
      _
    $region303: #{tpu_custom_call.1} parent=1 // pred_check_branch
      %461 = sbr.rel (0) target = $region305
    $region304: #{tpu_custom_call.1} parent=1 // pred_region
      %463 = dma.done [#allocation18], 16
    $region305: #{tpu_custom_call.1} parent=1 // pred_fallthru
      _
    // Predicated region
    $region306: #{tpu_custom_call.1} parent=1 // pred_check
      _
    $region307: #{tpu_custom_call.1} parent=1 // pred_check_branch
      %465 = sbr.rel (0) target = $region309
    $region308: #{tpu_custom_call.1} parent=1 // pred_region
      %467 = dma.done [#allocation18], 16
    $region309: #{tpu_custom_call.1} parent=1 // pred_fallthru
      _
    // Predicated region
    $region310: #{tpu_custom_call.1} parent=1 // pred_check
      _
    $region311: #{tpu_custom_call.1} parent=1 // pred_check_branch
      %469 = sbr.rel (0) target = $region313
    $region312: #{tpu_custom_call.1} parent=1 // pred_region
      %471 = dma.done [#allocation21], 16
    $region313: #{tpu_custom_call.1} parent=1 // pred_fallthru
      _
    // Predicated region
    $region314: #{tpu_custom_call.1} parent=1 // pred_check
      _
    $region315: #{tpu_custom_call.1} parent=1 // pred_check_branch
      %473 = sbr.rel (0) target = $region317
    $region316: #{tpu_custom_call.1} parent=1 // pred_region
      %475 = dma.done [#allocation21], 16
    $region317: #{tpu_custom_call.1} parent=1 // pred_fallthru
      _
    // Predicated region
    $region318: #{tpu_custom_call.1} parent=1 // pred_check
      _
    $region319: #{tpu_custom_call.1} parent=1 // pred_check_branch
      %477 = sbr.rel (0) target = $region321
    $region320: #{tpu_custom_call.1} parent=1 // pred_region
      %479 = dma.done [#allocation24], 16
    $region321: #{tpu_custom_call.1} parent=1 // pred_fallthru
      _
    // Predicated region
    $region322: #{tpu_custom_call.1} parent=1 // pred_check
      _
    $region323: #{tpu_custom_call.1} parent=1 // pred_check_branch
      %481 = sbr.rel (0) target = $region325
    $region324: #{tpu_custom_call.1} parent=1 // pred_region
      %483 = dma.done [#allocation24], 16
    $region325: #{tpu_custom_call.1} parent=1 // pred_fallthru
      _
    // Predicated region
    $region326: #{tpu_custom_call.1} parent=1 // pred_check
      _
    $region327: #{tpu_custom_call.1} parent=1 // pred_check_branch
      %485 = sbr.rel (0) target = $region329
    $region328: #{tpu_custom_call.1} parent=1 // pred_region
      %487 = dma.done [#allocation27], 16
    $region329: #{tpu_custom_call.1} parent=1 // pred_fallthru
      _
    %v488 = vld [vmem:[%s1] sm:$0x3]
    %v489 = vld [vmem:[%s3] sm:$0x3]
    %v490 = vld [vmem:[%s5] sm:$0x3]
    %v491 = vld [vmem:[%s7] sm:$0xff]
    %v492 = vld [vmem:[%s7 + $0x8] sm:$0xff]
    %v493 = vld [vmem:[%s7 + $0x10] sm:$0xff]
    %v494 = vld [vmem:[%s7 + $0x18] sm:$0xff]
    %v495 = vld [vmem:[%s7 + $0x20] sm:$0xff]
    %v496 = vld [vmem:[%s7 + $0x28] sm:$0xff]
    %v497 = vld [vmem:[%s7 + $0x30] sm:$0xff]
    %v498 = vld [vmem:[%s7 + $0x38] sm:$0xff]
    %v499 = vld [vmem:[%s7 + $0x40] sm:$0xff]
    %v500 = vld [vmem:[%s7 + $0x48] sm:$0xff]
    %v501 = vld [vmem:[%s7 + $0x50] sm:$0xff]
    %v502 = vld [vmem:[%s7 + $0x58] sm:$0xff]
    %v503 = vld [vmem:[%s7 + $0x60] sm:$0xff]
    %v504 = vld [vmem:[%s7 + $0x68] sm:$0xff]
    %v505 = vld [vmem:[%s7 + $0x70] sm:$0xff]
    %v506 = vld [vmem:[%s7 + $0x78] sm:$0xff]
    %v507 = vld [vmem:[%s7 + $0x80] sm:$0xff]
    %v508 = vld [vmem:[%s7 + $0x88] sm:$0xff]
    %v509 = vld [vmem:[%s7 + $0x90] sm:$0xff]
    %v510 = vld [vmem:[%s7 + $0x98] sm:$0xff]
    %v511 = vld [vmem:[%s7 + $0xa0] sm:$0xff]
    %v512 = vld [vmem:[%s7 + $0xa8] sm:$0xf]
    %v513 = vld [vmem:[%s7 + $0xb0] sm:$0xf]
    %v514 = vld [vmem:[%s7 + $0xb8] sm:$0xf]
    %v515 = vld [vmem:[%s9] sm:$0x7]
    %v516 = vld [vmem:[%s11] sm:$0xff]
    %v517 = vld [vmem:[%s11 + $0x8] sm:$0xff]
    %v518 = vld [vmem:[%s11 + $0x10] sm:$0xff]
    %v519 = vld [vmem:[%s11 + $0x18] sm:$0xff]
    %v520 = vld [vmem:[%s11 + $0x20] sm:$0xff]
    %v521 = vld [vmem:[%s11 + $0x28] sm:$0xff]
    %v522 = vld [vmem:[%s11 + $0x30] sm:$0xff]
    %v523 = vld [vmem:[%s11 + $0x38] sm:$0xff]
    %v524 = vld [vmem:[%s11 + $0x40] sm:$0xff]
    %v525 = vld [vmem:[%s11 + $0x48] sm:$0xff]
    %v526 = vld [vmem:[%s11 + $0x50] sm:$0xff]
    %v527 = vld [vmem:[%s11 + $0x58] sm:$0xff]
    %v528 = vld [vmem:[%s11 + $0x60] sm:$0xff]
    %v529 = vld [vmem:[%s11 + $0x68] sm:$0xff]
    %v530 = vld [vmem:[%s11 + $0x70] sm:$0xff]
    %v531 = vld [vmem:[%s11 + $0x78] sm:$0xff]
    %v532 = vld [vmem:[%s11 + $0x80] sm:$0xff]
    %v533 = vld [vmem:[%s11 + $0x88] sm:$0xff]
    %v534 = vld [vmem:[%s11 + $0x90] sm:$0xff]
    %v535 = vld [vmem:[%s11 + $0x98] sm:$0xff]
    %v536 = vld [vmem:[%s11 + $0xa0] sm:$0xff]
    %v537 = vld [vmem:[%s11 + $0xa8] sm:$0xff]
    %v538 = vld [vmem:[%s11 + $0xb0] sm:$0xff]
    %v539 = vld [vmem:[%s11 + $0xb8] sm:$0xff]
    %v540 = vld [vmem:[%s11 + $0xc0] sm:$0xff]
    %v541 = vld [vmem:[%s11 + $0xc8] sm:$0xff]
    %v542 = vld [vmem:[%s11 + $0xd0] sm:$0xff]
    %v543 = vld [vmem:[%s11 + $0xd8] sm:$0xff]
    %v544 = vld [vmem:[%s11 + $0xe0] sm:$0xff]
    %v545 = vld [vmem:[%s11 + $0xe8] sm:$0xff]
    %v546 = vld [vmem:[%s11 + $0xf0] sm:$0xff]
    %v547 = vld [vmem:[%s11 + $0xf8] sm:$0xff]
    %v548 = vld [vmem:[%s11 + $0x100] sm:$0xff]
    %v549 = vld [vmem:[%s11 + $0x108] sm:$0xff]
    %v550 = vld [vmem:[%s11 + $0x110] sm:$0xff]
    %v551 = vld [vmem:[%s11 + $0x118] sm:$0xff]
    %v552 = vld [vmem:[%s11 + $0x120] sm:$0xff]
    %v553 = vld [vmem:[%s11 + $0x128] sm:$0xff]
    %v554 = vld [vmem:[%s11 + $0x130] sm:$0xff]
    %v555 = vld [vmem:[%s11 + $0x138] sm:$0xff]
    %v556 = vld [vmem:[%s11 + $0x140] sm:$0xff]
    %v557 = vld [vmem:[%s11 + $0x148] sm:$0xff]
    %v558 = vld [vmem:[%s11 + $0x150] sm:$0xff]
    %v559 = vld [vmem:[%s11 + $0x158] sm:$0xff]
    %v560 = vld [vmem:[%s11 + $0x160] sm:$0xff]
    %v561 = vld [vmem:[%s11 + $0x168] sm:$0xff]
    %v562 = vld [vmem:[%s11 + $0x170] sm:$0xff]
    %v563 = vld [vmem:[%s11 + $0x178] sm:$0xff]
    %v564 = vld [vmem:[%s13] sm:$0x1]
    %v565 = vld [vmem:[%s15] sm:$0xff]
    %v566 = vld [vmem:[%s15 + $0x8] sm:$0xff]
    %v567 = vld [vmem:[%s15 + $0x10] sm:$0xff]
    %v568 = vld [vmem:[%s15 + $0x18] sm:$0xff]
    %v569 = vld [vmem:[%s15 + $0x20] sm:$0xff]
    %v570 = vld [vmem:[%s15 + $0x28] sm:$0xff]
    %v571 = vld [vmem:[%s15 + $0x30] sm:$0xff]
    %v572 = vld [vmem:[%s15 + $0x38] sm:$0xf]
    %v573 = vld [vmem:[%s17] sm:$0x1]
    %v574 = vld [vmem:[%s19] sm:$0x1]
    %v575 = vld [vmem:[%s21] sm:$0x1]
    %v576 = vld [vmem:[%s23] sm:$0xff]
    %v577 = vld [vmem:[%s23 + $0x8] sm:$0xff]
    %v578 = vld [vmem:[%s23 + $0x10] sm:$0xff]
    %v579 = vld [vmem:[%s23 + $0x18] sm:$0xff]
    %v580 = vld [vmem:[%s23 + $0x20] sm:$0xff]
    %v581 = vld [vmem:[%s23 + $0x28] sm:$0xff]
    %v582 = vld [vmem:[%s23 + $0x30] sm:$0xff]
    %v583 = vld [vmem:[%s23 + $0x38] sm:$0xff]
    %v584 = vld [vmem:[%s23 + $0x40] sm:$0xff]
    %v585 = vld [vmem:[%s25] sm:$0xff]
    %v586 = vld [vmem:[%s25 + $0x8] sm:$0xf]
    %v588 = vperm.slane %v515, 0
    %v589 = vperm.slane %v515, 1
    %v590 = vperm.slane %v515, 2
    %vm594 = vcmask 490496
    %v596 = vsel %vm594, %v488, 0
    %vm598 = vcmask 1043456
    %v600 = vsel %vm598, %v512, 0
    %v603 = vsel %vm598, %v513, 0
    %v606 = vsel %vm598, %v514, 0
    %608 = vmatpush.msra.mxu0 0.0
    %609 = vmatpush.msra.mxu0 0.0
    %610 = vmatpush.msra.mxu0 0.0
    %611 = vmatpush.msra.mxu0 0.0
    %612 = vmatpush.msra.mxu0 0.0
    %613 = vmatpush.msra.mxu0 0.0
    %614 = vmatpush.msra.mxu0 0.0
    %615 = vmatpush.msra.mxu0 0.0
    %616 = vmatpush.msra.mxu0 %v600
    %617 = vmatpush.msra.mxu0 %v509
    %618 = vmatpush.msra.mxu0 %v506
    %619 = vmatpush.msra.mxu0 %v503
    %620 = vmatpush.msra.mxu0 %v500
    %621 = vmatpush.msra.mxu0 %v497
    %622 = vmatpush.msra.mxu0 %v494
    %623 = vmatpush.msra.mxu0 %v491
    %624 = vmatmul.f32.gmra.mxu0 %v596
    %v625 = vpop.f32.mrf.mxu0
    %v626 = vadd.f32 %v588, %v625
    %627 = vdwg.mxu0
    %628 = vmatpush.msra.mxu0 0.0
    %629 = vmatpush.msra.mxu0 0.0
    %630 = vmatpush.msra.mxu0 0.0
    %631 = vmatpush.msra.mxu0 0.0
    %632 = vmatpush.msra.mxu0 0.0
    %633 = vmatpush.msra.mxu0 0.0
    %634 = vmatpush.msra.mxu0 0.0
    %635 = vmatpush.msra.mxu0 0.0
    %636 = vmatpush.msra.mxu0 %v603
    %637 = vmatpush.msra.mxu0 %v510
    %638 = vmatpush.msra.mxu0 %v507
    %639 = vmatpush.msra.mxu0 %v504
    %640 = vmatpush.msra.mxu0 %v501
    %641 = vmatpush.msra.mxu0 %v498
    %642 = vmatpush.msra.mxu0 %v495
    %643 = vmatpush.msra.mxu0 %v492
    %644 = vmatmul.f32.gmra.mxu0 %v596
    %v645 = vpop.f32.mrf.mxu0
    %v646 = vadd.f32 %v589, %v645
    %647 = vdwg.mxu0
    %648 = vmatpush.msra.mxu0 0.0
    %649 = vmatpush.msra.mxu0 0.0
    %650 = vmatpush.msra.mxu0 0.0
    %651 = vmatpush.msra.mxu0 0.0
    %652 = vmatpush.msra.mxu0 0.0
    %653 = vmatpush.msra.mxu0 0.0
    %654 = vmatpush.msra.mxu0 0.0
    %655 = vmatpush.msra.mxu0 0.0
    %656 = vmatpush.msra.mxu0 %v606
    %657 = vmatpush.msra.mxu0 %v511
    %658 = vmatpush.msra.mxu0 %v508
    %659 = vmatpush.msra.mxu0 %v505
    %660 = vmatpush.msra.mxu0 %v502
    %661 = vmatpush.msra.mxu0 %v499
    %662 = vmatpush.msra.mxu0 %v496
    %663 = vmatpush.msra.mxu0 %v493
    %664 = vmatmul.f32.gmra.mxu0 %v596
    %v665 = vpop.f32.mrf.mxu0
    %v666 = vadd.f32 %v590, %v665
    %667 = vdwg.mxu0
    %v668 = vmax.f32 %v626, 0.0
    %v669 = vmax.f32 %v646, 0.0
    %v670 = vmax.f32 %v666, 0.0
    %v672 = vperm.slane %v564, 0
    %674 = vmatpush.msra.mxu0 %v531
    %675 = vmatpush.msra.mxu0 %v530
    %676 = vmatpush.msra.mxu0 %v529
    %677 = vmatpush.msra.mxu0 %v528
    %678 = vmatpush.msra.mxu0 %v527
    %679 = vmatpush.msra.mxu0 %v526
    %680 = vmatpush.msra.mxu0 %v525
    %681 = vmatpush.msra.mxu0 %v524
    %682 = vmatpush.msra.mxu0 %v523
    %683 = vmatpush.msra.mxu0 %v522
    %684 = vmatpush.msra.mxu0 %v521
    %685 = vmatpush.msra.mxu0 %v520
    %686 = vmatpush.msra.mxu0 %v519
    %687 = vmatpush.msra.mxu0 %v518
    %688 = vmatpush.msra.mxu0 %v517
    %689 = vmatpush.msra.mxu0 %v516
    %690 = vmatmul.f32.gmra.mxu0 %v668
    %v691 = vpop.f32.mrf.mxu0
    %v692 = vadd.f32 %v672, %v691
    %693 = vdwg.mxu0
    %694 = vmatpush.msra.mxu0 %v547
    %695 = vmatpush.msra.mxu0 %v546
    %696 = vmatpush.msra.mxu0 %v545
    %697 = vmatpush.msra.mxu0 %v544
    %698 = vmatpush.msra.mxu0 %v543
    %699 = vmatpush.msra.mxu0 %v542
    %700 = vmatpush.msra.mxu0 %v541
    %701 = vmatpush.msra.mxu0 %v540
    %702 = vmatpush.msra.mxu0 %v539
    %703 = vmatpush.msra.mxu0 %v538
    %704 = vmatpush.msra.mxu0 %v537
    %705 = vmatpush.msra.mxu0 %v536
    %706 = vmatpush.msra.mxu0 %v535
    %707 = vmatpush.msra.mxu0 %v534
    %708 = vmatpush.msra.mxu0 %v533
    %709 = vmatpush.msra.mxu0 %v532
    %710 = vmatmul.f32.gmra.mxu0 %v669
    %v711 = vpop.f32.mrf.mxu0
    %v712 = vadd.f32 %v692, %v711
    %713 = vdwg.mxu0
    %714 = vmatpush.msra.mxu0 %v563
    %715 = vmatpush.msra.mxu0 %v562
    %716 = vmatpush.msra.mxu0 %v561
    %717 = vmatpush.msra.mxu0 %v560
    %718 = vmatpush.msra.mxu0 %v559
    %719 = vmatpush.msra.mxu0 %v558
    %720 = vmatpush.msra.mxu0 %v557
    %721 = vmatpush.msra.mxu0 %v556
    %722 = vmatpush.msra.mxu0 %v555
    %723 = vmatpush.msra.mxu0 %v554
    %724 = vmatpush.msra.mxu0 %v553
    %725 = vmatpush.msra.mxu0 %v552
    %726 = vmatpush.msra.mxu0 %v551
    %727 = vmatpush.msra.mxu0 %v550
    %728 = vmatpush.msra.mxu0 %v549
    %729 = vmatpush.msra.mxu0 %v548
    %730 = vmatmul.f32.gmra.mxu0 %v670
    %v731 = vpop.f32.mrf.mxu0
    %v732 = vadd.f32 %v712, %v731
    %733 = vdwg.mxu0
    %v735 = vperm.slane %v573, 0
    %v738 = vsel %vm598, %v572, 0
    %740 = vmatpush.msra.mxu0 0.0
    %741 = vmatpush.msra.mxu0 0.0
    %742 = vmatpush.msra.mxu0 0.0
    %743 = vmatpush.msra.mxu0 0.0
    %744 = vmatpush.msra.mxu0 0.0
    %745 = vmatpush.msra.mxu0 0.0
    %746 = vmatpush.msra.mxu0 0.0
    %747 = vmatpush.msra.mxu0 0.0
    %748 = vmatpush.msra.mxu0 %v738
    %749 = vmatpush.msra.mxu0 %v571
    %750 = vmatpush.msra.mxu0 %v570
    %751 = vmatpush.msra.mxu0 %v569
    %752 = vmatpush.msra.mxu0 %v568
    %753 = vmatpush.msra.mxu0 %v567
    %754 = vmatpush.msra.mxu0 %v566
    %755 = vmatpush.msra.mxu0 %v565
    %756 = vmatmul.f32.gmra.mxu0 %v596
    %v757 = vpop.f32.mrf.mxu0
    %v758 = vadd.f32 %v735, %v757
    %759 = vdwg.mxu0
    %v760 = vadd.f32 %v732, %v758
    %vm761 = vcmask 588800
    %v763 = vsel %vm761, %v760, 0
    %765 = vmatpush.msra.mxu0 0.0
    %766 = vmatpush.msra.mxu0 0.0
    %767 = vmatpush.msra.mxu0 0.0
    %768 = vmatpush.msra.mxu0 0.0
    %769 = vmatpush.msra.mxu0 0.0
    %770 = vmatpush.msra.mxu0 0.0
    %771 = vmatpush.msra.mxu0 0.0
    %772 = vmatpush.msra.mxu0 %v584
    %773 = vmatpush.msra.mxu0 %v583
    %774 = vmatpush.msra.mxu0 %v582
    %775 = vmatpush.msra.mxu0 %v581
    %776 = vmatpush.msra.mxu0 %v580
    %777 = vmatpush.msra.mxu0 %v579
    %778 = vmatpush.msra.mxu0 %v578
    %779 = vmatpush.msra.mxu0 %v577
    %780 = vmatpush.msra.mxu0 %v576
    %781 = vmatmul.f32.gmra.mxu0 %v763
    %v782 = vpop.f32.mrf.mxu0
    %v783 = vadd.f32 0.0, %v782
    %784 = vdwg.mxu0
    %vm785 = vcmask 97280
    %v787 = vsel %vm785, %v783, 0
    %v790 = vsel %vm598, %v586, 0
    %792 = vmatpush.msra.mxu0 0.0
    %793 = vmatpush.msra.mxu0 0.0
    %794 = vmatpush.msra.mxu0 0.0
    %795 = vmatpush.msra.mxu0 0.0
    %796 = vmatpush.msra.mxu0 0.0
    %797 = vmatpush.msra.mxu0 0.0
    %798 = vmatpush.msra.mxu0 0.0
    %799 = vmatpush.msra.mxu0 0.0
    %800 = vmatpush.msra.mxu0 0.0
    %801 = vmatpush.msra.mxu0 0.0
    %802 = vmatpush.msra.mxu0 0.0
    %803 = vmatpush.msra.mxu0 0.0
    %804 = vmatpush.msra.mxu0 0.0
    %805 = vmatpush.msra.mxu0 0.0
    %806 = vmatpush.msra.mxu0 %v790
    %807 = vmatpush.msra.mxu0 %v585
    %808 = vmatmul.f32.gmra.mxu0 %v787
    %v809 = vpop.f32.mrf.mxu0
    %v810 = vadd.f32 0.0, %v809
    %811 = vdwg.mxu0
    %v812 = vsub.f32 %v760, %v810
    %v813 = vmul.f32 %v812, %v812
    %v815 = vsel %vm761, %v813, 0
    %817 = vmatpush.msra.mxu0 0.0
    %818 = vmatpush.msra.mxu0 0.0
    %819 = vmatpush.msra.mxu0 0.0
    %820 = vmatpush.msra.mxu0 0.0
    %821 = vmatpush.msra.mxu0 0.0
    %822 = vmatpush.msra.mxu0 0.0
    %823 = vmatpush.msra.mxu0 0.0
    %824 = vmatpush.msra.mxu0 %v584
    %825 = vmatpush.msra.mxu0 %v583
    %826 = vmatpush.msra.mxu0 %v582
    %827 = vmatpush.msra.mxu0 %v581
    %828 = vmatpush.msra.mxu0 %v580
    %829 = vmatpush.msra.mxu0 %v579
    %830 = vmatpush.msra.mxu0 %v578
    %831 = vmatpush.msra.mxu0 %v577
    %832 = vmatpush.msra.mxu0 %v576
    %833 = vmatmul.f32.gmra.mxu0 %v815
    %v834 = vpop.f32.mrf.mxu0
    %v835 = vadd.f32 1e-05, %v834
    %836 = vdwg.mxu0
    %v837 = vrsqrt.pop %v835
    %v838 = vmul.f32 %v837, %v835
    %v839 = vmul.f32 %v838, %v837
    %v840 = vmul.f32 0.5, %v839
    %v841 = vsub.f32 1.5, %v840
    %v842 = vmul.f32 %v837, %v841
    %vm843 = vweird.f32 %v835
    %vm844 = vweird.f32 %v837
    %vm845 = vmor %vm843, %vm844
    %v846 = vsel %vm845, %v837, %v842
    %v848 = vsel %vm785, %v846, 0
    %850 = vmatpush.msra.mxu0 0.0
    %851 = vmatpush.msra.mxu0 0.0
    %852 = vmatpush.msra.mxu0 0.0
    %853 = vmatpush.msra.mxu0 0.0
    %854 = vmatpush.msra.mxu0 0.0
    %855 = vmatpush.msra.mxu0 0.0
    %856 = vmatpush.msra.mxu0 0.0
    %857 = vmatpush.msra.mxu0 0.0
    %858 = vmatpush.msra.mxu0 0.0
    %859 = vmatpush.msra.mxu0 0.0
    %860 = vmatpush.msra.mxu0 0.0
    %861 = vmatpush.msra.mxu0 0.0
    %862 = vmatpush.msra.mxu0 0.0
    %863 = vmatpush.msra.mxu0 0.0
    %864 = vmatpush.msra.mxu0 %v790
    %865 = vmatpush.msra.mxu0 %v585
    %866 = vmatmul.f32.gmra.mxu0 %v848
    %v867 = vpop.f32.mrf.mxu0
    %v868 = vadd.f32 0.0, %v867
    %869 = vdwg.mxu0
    %v870 = vmul.f32 %v812, %v868
    %v872 = vperm.slane %v574, 0
    %v874 = vmul.f32 %v870, %v872
    %v876 = vperm.slane %v575, 0
    %v878 = vadd.f32 %v874, %v876
    %v879 = vld [vmem:[%s27] sm:$0xff]
    %v880 = vld [vmem:[%s27 + $0x8] sm:$0xff]
    %v881 = vld [vmem:[%s27 + $0x10] sm:$0xff]
    %v882 = vld [vmem:[%s27 + $0x18] sm:$0xff]
    %v883 = vld [vmem:[%s29] sm:$0xf]
    %v884 = vld [vmem:[%s31] sm:$0xf]
    %v885 = vld [vmem:[%s33] sm:$0x1]
    %v886 = vld [vmem:[%s35] sm:$0x1]
    %v887 = vld [vmem:[%s37] sm:$0x1]
    %v888 = vld [vmem:[%s39] sm:$0x1]
    %vm889 = vcmask 261120
    %v891 = vsel %vm889, %v490, 0
    %893 = vmatpush.msra.mxu0 0.0
    %894 = vmatpush.msra.mxu0 0.0
    %895 = vmatpush.msra.mxu0 0.0
    %896 = vmatpush.msra.mxu0 0.0
    %897 = vmatpush.msra.mxu0 0.0
    %898 = vmatpush.msra.mxu0 0.0
    %899 = vmatpush.msra.mxu0 0.0
    %900 = vmatpush.msra.mxu0 0.0
    %901 = vmatpush.msra.mxu0 0.0
    %902 = vmatpush.msra.mxu0 0.0
    %903 = vmatpush.msra.mxu0 0.0
    %904 = vmatpush.msra.mxu0 0.0
    %905 = vmatpush.msra.mxu0 %v882
    %906 = vmatpush.msra.mxu0 %v881
    %907 = vmatpush.msra.mxu0 %v880
    %908 = vmatpush.msra.mxu0 %v879
    %909 = vmatmul.f32.gmra.mxu0 %v891
    %v910 = vpop.f32.mrf.mxu0
    %v911 = vadd.f32 0.0, %v910
    %912 = vdwg.mxu0
    %vm913 = vcmask 31744
    %v915 = vsel %vm913, %v911, 0
    %v918 = vsel %vm598, %v883, 0
    %920 = vmatpush.msra.mxu0 0.0
    %921 = vmatpush.msra.mxu0 0.0
    %922 = vmatpush.msra.mxu0 0.0
    %923 = vmatpush.msra.mxu0 0.0
    %924 = vmatpush.msra.mxu0 0.0
    %925 = vmatpush.msra.mxu0 0.0
    %926 = vmatpush.msra.mxu0 0.0
    %927 = vmatpush.msra.mxu0 0.0
    %928 = vmatpush.msra.mxu0 0.0
    %929 = vmatpush.msra.mxu0 0.0
    %930 = vmatpush.msra.mxu0 0.0
    %931 = vmatpush.msra.mxu0 0.0
    %932 = vmatpush.msra.mxu0 0.0
    %933 = vmatpush.msra.mxu0 0.0
    %934 = vmatpush.msra.mxu0 0.0
    %935 = vmatpush.msra.mxu0 %v918
    %936 = vmatmul.f32.gmra.mxu0 %v915
    %v937 = vpop.f32.mrf.mxu0
    %v938 = vadd.f32 0.0, %v937
    %939 = vdwg.mxu0
    %v940 = vsub.f32 %v490, %v938
    %v941 = vmul.f32 %v940, %v940
    %v943 = vsel %vm889, %v941, 0
    %945 = vmatpush.msra.mxu0 0.0
    %946 = vmatpush.msra.mxu0 0.0
    %947 = vmatpush.msra.mxu0 0.0
    %948 = vmatpush.msra.mxu0 0.0
    %949 = vmatpush.msra.mxu0 0.0
    %950 = vmatpush.msra.mxu0 0.0
    %951 = vmatpush.msra.mxu0 0.0
    %952 = vmatpush.msra.mxu0 0.0
    %953 = vmatpush.msra.mxu0 0.0
    %954 = vmatpush.msra.mxu0 0.0
    %955 = vmatpush.msra.mxu0 0.0
    %956 = vmatpush.msra.mxu0 0.0
    %957 = vmatpush.msra.mxu0 %v882
    %958 = vmatpush.msra.mxu0 %v881
    %959 = vmatpush.msra.mxu0 %v880
    %960 = vmatpush.msra.mxu0 %v879
    %961 = vmatmul.f32.gmra.mxu0 %v943
    %v962 = vpop.f32.mrf.mxu0
    %v963 = vadd.f32 1e-05, %v962
    %964 = vdwg.mxu0
    %v965 = vrsqrt.pop %v963
    %v966 = vmul.f32 %v965, %v963
    %v967 = vmul.f32 %v966, %v965
    %v968 = vmul.f32 0.5, %v967
    %v969 = vsub.f32 1.5, %v968
    %v970 = vmul.f32 %v965, %v969
    %vm971 = vweird.f32 %v963
    %vm972 = vweird.f32 %v965
    %vm973 = vmor %vm971, %vm972
    %v974 = vsel %vm973, %v965, %v970
    %v976 = vsel %vm913, %v974, 0
    %978 = vmatpush.msra.mxu0 0.0
    %979 = vmatpush.msra.mxu0 0.0
    %980 = vmatpush.msra.mxu0 0.0
    %981 = vmatpush.msra.mxu0 0.0
    %982 = vmatpush.msra.mxu0 0.0
    %983 = vmatpush.msra.mxu0 0.0
    %984 = vmatpush.msra.mxu0 0.0
    %985 = vmatpush.msra.mxu0 0.0
    %986 = vmatpush.msra.mxu0 0.0
    %987 = vmatpush.msra.mxu0 0.0
    %988 = vmatpush.msra.mxu0 0.0
    %989 = vmatpush.msra.mxu0 0.0
    %990 = vmatpush.msra.mxu0 0.0
    %991 = vmatpush.msra.mxu0 0.0
    %992 = vmatpush.msra.mxu0 0.0
    %993 = vmatpush.msra.mxu0 %v918
    %994 = vmatmul.f32.gmra.mxu0 %v976
    %v995 = vpop.f32.mrf.mxu0
    %v996 = vadd.f32 0.0, %v995
    %997 = vdwg.mxu0
    %v998 = vmul.f32 %v940, %v996
    %v1000 = vperm.slane %v885, 0
    %v1002 = vmul.f32 %v998, %v1000
    %v1004 = vperm.slane %v886, 0
    %v1006 = vadd.f32 %v1002, %v1004
    %v1007 = vld [vmem:[%s41] sm:$0xff]
    %v1008 = vld [vmem:[%s41 + $0x8] sm:$0xff]
    %v1009 = vld [vmem:[%s41 + $0x10] sm:$0xff]
    %v1010 = vld [vmem:[%s41 + $0x18] sm:$0xff]
    %v1011 = vld [vmem:[%s41 + $0x20] sm:$0xff]
    %v1012 = vld [vmem:[%s41 + $0x28] sm:$0xff]
    %v1013 = vld [vmem:[%s41 + $0x30] sm:$0xff]
    %v1014 = vld [vmem:[%s41 + $0x38] sm:$0xff]
    %v1015 = vld [vmem:[%s41 + $0x40] sm:$0xff]
    %v1016 = vld [vmem:[%s43] sm:$0x3f]
    %v1017 = vld [vmem:[%s45] sm:$0xff]
    %v1018 = vld [vmem:[%s45 + $0x8] sm:$0xff]
    %v1019 = vld [vmem:[%s45 + $0x10] sm:$0xff]
    %v1020 = vld [vmem:[%s45 + $0x18] sm:$0xff]
    %v1021 = vld [vmem:[%s47] sm:$0x1]
    %v1022 = vld [vmem:[%s49] sm:$0xff]
    %v1023 = vld [vmem:[%s49 + $0x8] sm:$0xff]
    %v1024 = vld [vmem:[%s49 + $0x10] sm:$0xff]
    %v1025 = vld [vmem:[%s49 + $0x18] sm:$0xff]
    %v1026 = vld [vmem:[%s51] sm:$0x1]
    %v1027 = vld [vmem:[%s53] sm:$0xff]
    %v1028 = vld [vmem:[%s53 + $0x8] sm:$0xff]
    %v1029 = vld [vmem:[%s53 + $0x10] sm:$0xff]
    %v1030 = vld [vmem:[%s53 + $0x18] sm:$0xff]
    %v1031 = vld [vmem:[%s53 + $0x20] sm:$0xff]
    %v1032 = vld [vmem:[%s53 + $0x28] sm:$0xff]
    %v1033 = vld [vmem:[%s53 + $0x30] sm:$0xff]
    %v1034 = vld [vmem:[%s53 + $0x38] sm:$0xff]
    %v1035 = vld [vmem:[%s53 + $0x40] sm:$0xff]
    %v1036 = vld [vmem:[%s55] sm:$0x3f]
    %v1037 = vld [vmem:[%s57] sm:$0xff]
    %v1038 = vld [vmem:[%s57 + $0x8] sm:$0xff]
    %v1039 = vld [vmem:[%s57 + $0x10] sm:$0xff]
    %v1040 = vld [vmem:[%s57 + $0x18] sm:$0xff]
    %v1041 = vld [vmem:[%s59] sm:$0x1]
    %v1042 = vld [vmem:[%s61] sm:$0x1]
    %v1043 = vld [vmem:[%s63] sm:$0x1]
    %vm1044 = vcmask 48128
    %v1046 = vsel %vm1044, %v489, 0
    %vm1048 = vcmask 1045504
    %v1050 = vsel %vm1048, %v1016, 0
    %1052 = vmatpush.msra.mxu0 0.0
    %1053 = vmatpush.msra.mxu0 0.0
    %1054 = vmatpush.msra.mxu0 0.0
    %1055 = vmatpush.msra.mxu0 0.0
    %1056 = vmatpush.msra.mxu0 0.0
    %1057 = vmatpush.msra.mxu0 0.0
    %1058 = vmatpush.msra.mxu0 0.0
    %1059 = vmatpush.msra.mxu0 0.0
    %1060 = vmatpush.msra.mxu0 0.0
    %1061 = vmatpush.msra.mxu0 0.0
    %1062 = vmatpush.msra.mxu0 0.0
    %1063 = vmatpush.msra.mxu0 0.0
    %1064 = vmatpush.msra.mxu0 0.0
    %1065 = vmatpush.msra.mxu0 0.0
    %1066 = vmatpush.msra.mxu0 0.0
    %1067 = vmatpush.msra.mxu0 %v1050
    %1068 = vmatmul.f32.gmra.mxu0 %v1046
    %v1069 = vpop.f32.mrf.mxu0
    %v1070 = vadd.f32 0.0, %v1069
    %1071 = vdwg.mxu0
    %v1073 = vsel %vm761, %v878, 0
    %1075 = vmatpush.msra.mxu0 0.0
    %1076 = vmatpush.msra.mxu0 0.0
    %1077 = vmatpush.msra.mxu0 0.0
    %1078 = vmatpush.msra.mxu0 0.0
    %1079 = vmatpush.msra.mxu0 0.0
    %1080 = vmatpush.msra.mxu0 0.0
    %1081 = vmatpush.msra.mxu0 0.0
    %1082 = vmatpush.msra.mxu0 %v1015
    %1083 = vmatpush.msra.mxu0 %v1014
    %1084 = vmatpush.msra.mxu0 %v1013
    %1085 = vmatpush.msra.mxu0 %v1012
    %1086 = vmatpush.msra.mxu0 %v1011
    %1087 = vmatpush.msra.mxu0 %v1010
    %1088 = vmatpush.msra.mxu0 %v1009
    %1089 = vmatpush.msra.mxu0 %v1008
    %1090 = vmatpush.msra.mxu0 %v1007
    %1091 = vmatmul.f32.gmra.mxu0 %v1073
    %v1092 = vpop.f32.mrf.mxu0
    %v1093 = vadd.f32 %v1070, %v1092
    %1094 = vdwg.mxu0
    %v1096 = vsel %vm889, %v1006, 0
    %1098 = vmatpush.msra.mxu0 0.0
    %1099 = vmatpush.msra.mxu0 0.0
    %1100 = vmatpush.msra.mxu0 0.0
    %1101 = vmatpush.msra.mxu0 0.0
    %1102 = vmatpush.msra.mxu0 0.0
    %1103 = vmatpush.msra.mxu0 0.0
    %1104 = vmatpush.msra.mxu0 0.0
    %1105 = vmatpush.msra.mxu0 0.0
    %1106 = vmatpush.msra.mxu0 0.0
    %1107 = vmatpush.msra.mxu0 0.0
    %1108 = vmatpush.msra.mxu0 0.0
    %1109 = vmatpush.msra.mxu0 0.0
    %1110 = vmatpush.msra.mxu0 %v1020
    %1111 = vmatpush.msra.mxu0 %v1019
    %1112 = vmatpush.msra.mxu0 %v1018
    %1113 = vmatpush.msra.mxu0 %v1017
    %1114 = vmatmul.f32.gmra.mxu0 %v1096
    %v1115 = vpop.f32.mrf.mxu0
    %v1116 = vadd.f32 0.0, %v1115
    %1117 = vdwg.mxu0
    %v1118 = vadd.f32 %v1093, %v1116
    %v1120 = vperm.slane %v1021, 0
    %v1122 = vadd.f32 %v1118, %v1120
    %v1123 = vmax.f32 %v1122, 0.0
    %v1125 = vperm.slane %v1026, 0
    %v1128 = vsel %vm889, %v1123, 0
    %1130 = vmatpush.msra.mxu0 0.0
    %1131 = vmatpush.msra.mxu0 0.0
    %1132 = vmatpush.msra.mxu0 0.0
    %1133 = vmatpush.msra.mxu0 0.0
    %1134 = vmatpush.msra.mxu0 0.0
    %1135 = vmatpush.msra.mxu0 0.0
    %1136 = vmatpush.msra.mxu0 0.0
    %1137 = vmatpush.msra.mxu0 0.0
    %1138 = vmatpush.msra.mxu0 0.0
    %1139 = vmatpush.msra.mxu0 0.0
    %1140 = vmatpush.msra.mxu0 0.0
    %1141 = vmatpush.msra.mxu0 0.0
    %1142 = vmatpush.msra.mxu0 %v1025
    %1143 = vmatpush.msra.mxu0 %v1024
    %1144 = vmatpush.msra.mxu0 %v1023
    %1145 = vmatpush.msra.mxu0 %v1022
    %1146 = vmatmul.f32.gmra.mxu0 %v1128
    %v1147 = vpop.f32.mrf.mxu0
    %v1148 = vadd.f32 %v1125, %v1147
    %1149 = vdwg.mxu0
    %1150 = vmatpush.msra.mxu0 0.0
    %1151 = vmatpush.msra.mxu0 0.0
    %1152 = vmatpush.msra.mxu0 0.0
    %1153 = vmatpush.msra.mxu0 0.0
    %1154 = vmatpush.msra.mxu0 0.0
    %1155 = vmatpush.msra.mxu0 0.0
    %1156 = vmatpush.msra.mxu0 0.0
    %1157 = vmatpush.msra.mxu0 %v1035
    %1158 = vmatpush.msra.mxu0 %v1034
    %1159 = vmatpush.msra.mxu0 %v1033
    %1160 = vmatpush.msra.mxu0 %v1032
    %1161 = vmatpush.msra.mxu0 %v1031
    %1162 = vmatpush.msra.mxu0 %v1030
    %1163 = vmatpush.msra.mxu0 %v1029
    %1164 = vmatpush.msra.mxu0 %v1028
    %1165 = vmatpush.msra.mxu0 %v1027
    %1166 = vmatmul.f32.gmra.mxu0 %v1073
    %v1167 = vpop.f32.mrf.mxu0
    %v1168 = vadd.f32 0.0, %v1167
    %1169 = vdwg.mxu0
    %v1170 = vadd.f32 %v1148, %v1168
    %v1172 = vsel %vm1048, %v1036, 0
    %1174 = vmatpush.msra.mxu0 0.0
    %1175 = vmatpush.msra.mxu0 0.0
    %1176 = vmatpush.msra.mxu0 0.0
    %1177 = vmatpush.msra.mxu0 0.0
    %1178 = vmatpush.msra.mxu0 0.0
    %1179 = vmatpush.msra.mxu0 0.0
    %1180 = vmatpush.msra.mxu0 0.0
    %1181 = vmatpush.msra.mxu0 0.0
    %1182 = vmatpush.msra.mxu0 0.0
    %1183 = vmatpush.msra.mxu0 0.0
    %1184 = vmatpush.msra.mxu0 0.0
    %1185 = vmatpush.msra.mxu0 0.0
    %1186 = vmatpush.msra.mxu0 0.0
    %1187 = vmatpush.msra.mxu0 0.0
    %1188 = vmatpush.msra.mxu0 0.0
    %1189 = vmatpush.msra.mxu0 %v1172
    %1190 = vmatmul.f32.gmra.mxu0 %v1046
    %v1191 = vpop.f32.mrf.mxu0
    %v1192 = vadd.f32 0.0, %v1191
    %1193 = vdwg.mxu0
    %v1194 = vadd.f32 %v1170, %v1192
    %1195 = vmatpush.msra.mxu0 0.0
    %1196 = vmatpush.msra.mxu0 0.0
    %1197 = vmatpush.msra.mxu0 0.0
    %1198 = vmatpush.msra.mxu0 0.0
    %1199 = vmatpush.msra.mxu0 0.0
    %1200 = vmatpush.msra.mxu0 0.0
    %1201 = vmatpush.msra.mxu0 0.0
    %1202 = vmatpush.msra.mxu0 0.0
    %1203 = vmatpush.msra.mxu0 0.0
    %1204 = vmatpush.msra.mxu0 0.0
    %1205 = vmatpush.msra.mxu0 0.0
    %1206 = vmatpush.msra.mxu0 0.0
    %1207 = vmatpush.msra.mxu0 %v1040
    %1208 = vmatpush.msra.mxu0 %v1039
    %1209 = vmatpush.msra.mxu0 %v1038
    %1210 = vmatpush.msra.mxu0 %v1037
    %1211 = vmatmul.f32.gmra.mxu0 %v1096
    %v1212 = vpop.f32.mrf.mxu0
    %v1213 = vadd.f32 0.0, %v1212
    %1214 = vdwg.mxu0
    %v1215 = vadd.f32 %v1194, %v1213
    %v1217 = vperm.slane %v1041, 0
    %v1219 = vadd.f32 %v1215, %v1217
    %vm1220 = vcmask 254976
    %v1221 = vsel %vm1220, %v1219, 0.0
    %1222 = vadd.xlane.f32.xlu0 %v1221
    %v1223 = vpop.xlane.xlu0 %1222
    %v1224 = vrcp.pop 32.0
    %v1225 = vmul.f32 32.0, %v1224
    %v1226 = vsub.f32 1.0, %v1225
    %v1227 = vmul.f32 %v1224, %v1226
    %v1228 = vadd.f32 %v1224, %v1227
    %vm1229 = vweird.f32 %v1224
    %v1230 = vsel %vm1229, %v1224, %v1228
    %v1231 = vmul.f32 %v1223, %v1230
    %v1232 = vsub.f32 %v1219, %v1231
    %v1233 = vmul.f32 %v1232, %v1232
    %v1234 = vsel %vm1220, %v1233, 0.0
    %1235 = vadd.xlane.f32.xlu0 %v1234
    %v1236 = vpop.xlane.xlu0 %1235
    %v1237 = vmul.f32 %v1236, %v1230
    %v1238 = vadd.f32 %v1237, 1e-05
    %v1239 = vrsqrt.pop %v1238
    %v1240 = vmul.f32 %v1239, %v1238
    %v1241 = vmul.f32 %v1240, %v1239
    %v1242 = vmul.f32 0.5, %v1241
    %v1243 = vsub.f32 1.5, %v1242
    %v1244 = vmul.f32 %v1239, %v1243
    %vm1245 = vweird.f32 %v1238
    %vm1246 = vweird.f32 %v1239
    %vm1247 = vmor %vm1245, %vm1246
    %v1248 = vsel %vm1247, %v1239, %v1244
    %v1249 = vmul.f32 %v1232, %v1248
    %v1251 = vperm.slane %v1042, 0
    %v1253 = vmul.f32 %v1249, %v1251
    %v1255 = vperm.slane %v1043, 0
    %v1257 = vadd.f32 %v1253, %v1255
    %v1258 = vld [vmem:[%s65] sm:$0xff]
    %v1259 = vld [vmem:[%s65 + $0x8] sm:$0xff]
    %v1260 = vld [vmem:[%s65 + $0x10] sm:$0xff]
    %v1261 = vld [vmem:[%s65 + $0x18] sm:$0xff]
    %v1262 = vld [vmem:[%s67] sm:$0x1]
    %v1263 = vld [vmem:[%s69] sm:$0xff]
    %v1264 = vld [vmem:[%s69 + $0x8] sm:$0xff]
    %v1265 = vld [vmem:[%s69 + $0x10] sm:$0xff]
    %v1266 = vld [vmem:[%s69 + $0x18] sm:$0xff]
    %v1267 = vld [vmem:[%s71] sm:$0x1]
    %v1268 = vld [vmem:[%s73] sm:$0x1]
    %v1269 = vld [vmem:[#allocation2] sm:$0x1]
    %v1271 = vperm.slane %v1262, 0
    %v1274 = vsel %vm889, %v1257, 0
    %1276 = vmatpush.msra.mxu0 0.0
    %1277 = vmatpush.msra.mxu0 0.0
    %1278 = vmatpush.msra.mxu0 0.0
    %1279 = vmatpush.msra.mxu0 0.0
    %1280 = vmatpush.msra.mxu0 0.0
    %1281 = vmatpush.msra.mxu0 0.0
    %1282 = vmatpush.msra.mxu0 0.0
    %1283 = vmatpush.msra.mxu0 0.0
    %1284 = vmatpush.msra.mxu0 0.0
    %1285 = vmatpush.msra.mxu0 0.0
    %1286 = vmatpush.msra.mxu0 0.0
    %1287 = vmatpush.msra.mxu0 0.0
    %1288 = vmatpush.msra.mxu0 %v1261
    %1289 = vmatpush.msra.mxu0 %v1260
    %1290 = vmatpush.msra.mxu0 %v1259
    %1291 = vmatpush.msra.mxu0 %v1258
    %1292 = vmatmul.f32.gmra.mxu0 %v1274
    %v1293 = vpop.f32.mrf.mxu0
    %v1294 = vadd.f32 %v1271, %v1293
    %1295 = vdwg.mxu0
    %v1296 = vmax.f32 %v1294, 0.0
    %v1298 = vperm.slane %v1267, 0
    %v1301 = vsel %vm889, %v1296, 0
    %1303 = vmatpush.msra.mxu0 0.0
    %1304 = vmatpush.msra.mxu0 0.0
    %1305 = vmatpush.msra.mxu0 0.0
    %1306 = vmatpush.msra.mxu0 0.0
    %1307 = vmatpush.msra.mxu0 0.0
    %1308 = vmatpush.msra.mxu0 0.0
    %1309 = vmatpush.msra.mxu0 0.0
    %1310 = vmatpush.msra.mxu0 0.0
    %1311 = vmatpush.msra.mxu0 0.0
    %1312 = vmatpush.msra.mxu0 0.0
    %1313 = vmatpush.msra.mxu0 0.0
    %1314 = vmatpush.msra.mxu0 0.0
    %1315 = vmatpush.msra.mxu0 %v1266
    %1316 = vmatpush.msra.mxu0 %v1265
    %1317 = vmatpush.msra.mxu0 %v1264
    %1318 = vmatpush.msra.mxu0 %v1263
    %1319 = vmatmul.f32.gmra.mxu0 %v1301
    %v1320 = vpop.f32.mrf.mxu0
    %v1321 = vadd.f32 %v1298, %v1320
    %1322 = vdwg.mxu0
    %v1323 = vadd.f32 %v1321, %v1257
    %v1324 = vsel %vm1220, %v1323, 0.0
    %1325 = vadd.xlane.f32.xlu0 %v1324
    %v1326 = vpop.xlane.xlu0 %1325
    %v1327 = vmul.f32 %v1326, %v1230
    %v1328 = vsub.f32 %v1323, %v1327
    %v1329 = vmul.f32 %v1328, %v1328
    %v1330 = vsel %vm1220, %v1329, 0.0
    %1331 = vadd.xlane.f32.xlu0 %v1330
    %v1332 = vpop.xlane.xlu0 %1331
    %v1333 = vmul.f32 %v1332, %v1230
    %v1334 = vadd.f32 %v1333, 1e-05
    %v1335 = vrsqrt.pop %v1334
    %v1336 = vmul.f32 %v1335, %v1334
    %v1337 = vmul.f32 %v1336, %v1335
    %v1338 = vmul.f32 0.5, %v1337
    %v1339 = vsub.f32 1.5, %v1338
    %v1340 = vmul.f32 %v1335, %v1339
    %vm1341 = vweird.f32 %v1334
    %vm1342 = vweird.f32 %v1335
    %vm1343 = vmor %vm1341, %vm1342
    %v1344 = vsel %vm1343, %v1335, %v1340
    %v1345 = vmul.f32 %v1328, %v1344
    %v1347 = vperm.slane %v1268, 0
    %v1349 = vmul.f32 %v1345, %v1347
    %v1351 = vperm.slane %v1269, 0
    %v1353 = vadd.f32 %v1349, %v1351
    %v1354 = vld [vmem:[%s77] sm:$0xff]
    %v1355 = vld [vmem:[%s77 + $0x8] sm:$0xff]
    %v1356 = vld [vmem:[%s77 + $0x10] sm:$0xff]
    %v1357 = vld [vmem:[%s77 + $0x18] sm:$0xff]
    %v1358 = vld [vmem:[#allocation5] sm:$0x1]
    %v1359 = vld [vmem:[%s81] sm:$0xff]
    %v1360 = vld [vmem:[%s81 + $0x8] sm:$0xff]
    %v1361 = vld [vmem:[%s81 + $0x10] sm:$0xff]
    %v1362 = vld [vmem:[%s81 + $0x18] sm:$0xff]
    %v1363 = vld [vmem:[#allocation7] sm:$0x1]
    %v1364 = vld [vmem:[%s85] sm:$0xff]
    %v1365 = vld [vmem:[%s85 + $0x8] sm:$0xff]
    %v1366 = vld [vmem:[%s85 + $0x10] sm:$0xff]
    %v1367 = vld [vmem:[%s85 + $0x18] sm:$0xff]
    %v1368 = vld [vmem:[#allocation8] sm:$0x1]
    %v1369 = vld [vmem:[#allocation10] sm:$0x1]
    %v1370 = vld [vmem:[#allocation11] sm:$0x1]
    %v1372 = vperm.slane %v1358, 0
    %v1375 = vsel %vm889, %v1353, 0
    %1377 = vmatpush.msra.mxu0 0.0
    %1378 = vmatpush.msra.mxu0 0.0
    %1379 = vmatpush.msra.mxu0 0.0
    %1380 = vmatpush.msra.mxu0 0.0
    %1381 = vmatpush.msra.mxu0 0.0
    %1382 = vmatpush.msra.mxu0 0.0
    %1383 = vmatpush.msra.mxu0 0.0
    %1384 = vmatpush.msra.mxu0 0.0
    %1385 = vmatpush.msra.mxu0 0.0
    %1386 = vmatpush.msra.mxu0 0.0
    %1387 = vmatpush.msra.mxu0 0.0
    %1388 = vmatpush.msra.mxu0 0.0
    %1389 = vmatpush.msra.mxu0 %v1357
    %1390 = vmatpush.msra.mxu0 %v1356
    %1391 = vmatpush.msra.mxu0 %v1355
    %1392 = vmatpush.msra.mxu0 %v1354
    %1393 = vmatmul.f32.gmra.mxu0 %v1375
    %v1394 = vpop.f32.mrf.mxu0
    %v1395 = vadd.f32 %v1372, %v1394
    %1396 = vdwg.mxu0
    %v1397 = vmax.f32 %v1395, 0.0
    %v1399 = vperm.slane %v1363, 0
    %v1402 = vsel %vm889, %v1397, 0
    %1404 = vmatpush.msra.mxu0 0.0
    %1405 = vmatpush.msra.mxu0 0.0
    %1406 = vmatpush.msra.mxu0 0.0
    %1407 = vmatpush.msra.mxu0 0.0
    %1408 = vmatpush.msra.mxu0 0.0
    %1409 = vmatpush.msra.mxu0 0.0
    %1410 = vmatpush.msra.mxu0 0.0
    %1411 = vmatpush.msra.mxu0 0.0
    %1412 = vmatpush.msra.mxu0 0.0
    %1413 = vmatpush.msra.mxu0 0.0
    %1414 = vmatpush.msra.mxu0 0.0
    %1415 = vmatpush.msra.mxu0 0.0
    %1416 = vmatpush.msra.mxu0 %v1362
    %1417 = vmatpush.msra.mxu0 %v1361
    %1418 = vmatpush.msra.mxu0 %v1360
    %1419 = vmatpush.msra.mxu0 %v1359
    %1420 = vmatmul.f32.gmra.mxu0 %v1402
    %v1421 = vpop.f32.mrf.mxu0
    %v1422 = vadd.f32 %v1399, %v1421
    %1423 = vdwg.mxu0
    %v1425 = vperm.slane %v1368, 0
    %1427 = vmatpush.msra.mxu0 0.0
    %1428 = vmatpush.msra.mxu0 0.0
    %1429 = vmatpush.msra.mxu0 0.0
    %1430 = vmatpush.msra.mxu0 0.0
    %1431 = vmatpush.msra.mxu0 0.0
    %1432 = vmatpush.msra.mxu0 0.0
    %1433 = vmatpush.msra.mxu0 0.0
    %1434 = vmatpush.msra.mxu0 0.0
    %1435 = vmatpush.msra.mxu0 0.0
    %1436 = vmatpush.msra.mxu0 0.0
    %1437 = vmatpush.msra.mxu0 0.0
    %1438 = vmatpush.msra.mxu0 0.0
    %1439 = vmatpush.msra.mxu0 %v1367
    %1440 = vmatpush.msra.mxu0 %v1366
    %1441 = vmatpush.msra.mxu0 %v1365
    %1442 = vmatpush.msra.mxu0 %v1364
    %1443 = vmatmul.f32.gmra.mxu0 %v1375
    %v1444 = vpop.f32.mrf.mxu0
    %v1445 = vadd.f32 %v1425, %v1444
    %1446 = vdwg.mxu0
    %v1447 = vadd.f32 %v1422, %v1445
    %vm1448 = vcmask 123904
    %v1449 = vsel %vm1448, %v1447, 0.0
    %1450 = vadd.xlane.f32.xlu0 %v1449
    %v1451 = vpop.xlane.xlu0 %1450
    %v1452 = vrcp.pop 16.0
    %v1453 = vmul.f32 16.0, %v1452
    %v1454 = vsub.f32 1.0, %v1453
    %v1455 = vmul.f32 %v1452, %v1454
    %v1456 = vadd.f32 %v1452, %v1455
    %vm1457 = vweird.f32 %v1452
    %v1458 = vsel %vm1457, %v1452, %v1456
    %v1459 = vmul.f32 %v1451, %v1458
    %v1460 = vsub.f32 %v1447, %v1459
    %v1461 = vmul.f32 %v1460, %v1460
    %v1462 = vsel %vm1448, %v1461, 0.0
    %1463 = vadd.xlane.f32.xlu0 %v1462
    %v1464 = vpop.xlane.xlu0 %1463
    %v1465 = vmul.f32 %v1464, %v1458
    %v1466 = vadd.f32 %v1465, 1e-05
    %v1467 = vrsqrt.pop %v1466
    %v1468 = vmul.f32 %v1467, %v1466
    %v1469 = vmul.f32 %v1468, %v1467
    %v1470 = vmul.f32 0.5, %v1469
    %v1471 = vsub.f32 1.5, %v1470
    %v1472 = vmul.f32 %v1467, %v1471
    %vm1473 = vweird.f32 %v1466
    %vm1474 = vweird.f32 %v1467
    %vm1475 = vmor %vm1473, %vm1474
    %v1476 = vsel %vm1475, %v1467, %v1472
    %v1477 = vmul.f32 %v1460, %v1476
    %v1479 = vperm.slane %v1369, 0
    %v1481 = vmul.f32 %v1477, %v1479
    %v1483 = vperm.slane %v1370, 0
    %v1485 = vadd.f32 %v1481, %v1483
    %v1486 = vld [vmem:[%s93] sm:$0xff]
    %v1487 = vld [vmem:[%s93 + $0x8] sm:$0xff]
    %v1488 = vld [vmem:[#allocation13] sm:$0x1]
    %v1489 = vld [vmem:[%s97] sm:$0xff]
    %v1490 = vld [vmem:[%s97 + $0x8] sm:$0xff]
    %v1491 = vld [vmem:[%s97 + $0x10] sm:$0xff]
    %v1492 = vld [vmem:[%s97 + $0x18] sm:$0xff]
    %v1493 = vld [vmem:[#allocation14] sm:$0x1]
    %v1494 = vld [vmem:[#allocation16] sm:$0x1]
    %v1495 = vld [vmem:[#allocation17] sm:$0x1]
    %v1497 = vperm.slane %v1488, 0
    %vm1499 = vcmask 130048
    %v1501 = vsel %vm1499, %v1485, 0
    %1503 = vmatpush.msra.mxu0 0.0
    %1504 = vmatpush.msra.mxu0 0.0
    %1505 = vmatpush.msra.mxu0 0.0
    %1506 = vmatpush.msra.mxu0 0.0
    %1507 = vmatpush.msra.mxu0 0.0
    %1508 = vmatpush.msra.mxu0 0.0
    %1509 = vmatpush.msra.mxu0 0.0
    %1510 = vmatpush.msra.mxu0 0.0
    %1511 = vmatpush.msra.mxu0 0.0
    %1512 = vmatpush.msra.mxu0 0.0
    %1513 = vmatpush.msra.mxu0 0.0
    %1514 = vmatpush.msra.mxu0 0.0
    %1515 = vmatpush.msra.mxu0 0.0
    %1516 = vmatpush.msra.mxu0 0.0
    %1517 = vmatpush.msra.mxu0 %v1487
    %1518 = vmatpush.msra.mxu0 %v1486
    %1519 = vmatmul.f32.gmra.mxu0 %v1501
    %v1520 = vpop.f32.mrf.mxu0
    %v1521 = vadd.f32 %v1497, %v1520
    %1522 = vdwg.mxu0
    %v1523 = vmax.f32 %v1521, 0.0
    %v1525 = vperm.slane %v1493, 0
    %v1528 = vsel %vm889, %v1523, 0
    %1530 = vmatpush.msra.mxu0 0.0
    %1531 = vmatpush.msra.mxu0 0.0
    %1532 = vmatpush.msra.mxu0 0.0
    %1533 = vmatpush.msra.mxu0 0.0
    %1534 = vmatpush.msra.mxu0 0.0
    %1535 = vmatpush.msra.mxu0 0.0
    %1536 = vmatpush.msra.mxu0 0.0
    %1537 = vmatpush.msra.mxu0 0.0
    %1538 = vmatpush.msra.mxu0 0.0
    %1539 = vmatpush.msra.mxu0 0.0
    %1540 = vmatpush.msra.mxu0 0.0
    %1541 = vmatpush.msra.mxu0 0.0
    %1542 = vmatpush.msra.mxu0 %v1492
    %1543 = vmatpush.msra.mxu0 %v1491
    %1544 = vmatpush.msra.mxu0 %v1490
    %1545 = vmatpush.msra.mxu0 %v1489
    %1546 = vmatmul.f32.gmra.mxu0 %v1528
    %v1547 = vpop.f32.mrf.mxu0
    %v1548 = vadd.f32 %v1525, %v1547
    %1549 = vdwg.mxu0
    %v1550 = vadd.f32 %v1548, %v1485
    %v1551 = vsel %vm1448, %v1550, 0.0
    %1552 = vadd.xlane.f32.xlu0 %v1551
    %v1553 = vpop.xlane.xlu0 %1552
    %v1554 = vmul.f32 %v1553, %v1458
    %v1555 = vsub.f32 %v1550, %v1554
    %v1556 = vmul.f32 %v1555, %v1555
    %v1557 = vsel %vm1448, %v1556, 0.0
    %1558 = vadd.xlane.f32.xlu0 %v1557
    %v1559 = vpop.xlane.xlu0 %1558
    %v1560 = vmul.f32 %v1559, %v1458
    %v1561 = vadd.f32 %v1560, 1e-05
    %v1562 = vrsqrt.pop %v1561
    %v1563 = vmul.f32 %v1562, %v1561
    %v1564 = vmul.f32 %v1563, %v1562
    %v1565 = vmul.f32 0.5, %v1564
    %v1566 = vsub.f32 1.5, %v1565
    %v1567 = vmul.f32 %v1562, %v1566
    %vm1568 = vweird.f32 %v1561
    %vm1569 = vweird.f32 %v1562
    %vm1570 = vmor %vm1568, %vm1569
    %v1571 = vsel %vm1570, %v1562, %v1567
    %v1572 = vmul.f32 %v1555, %v1571
    %v1574 = vperm.slane %v1494, 0
    %v1576 = vmul.f32 %v1572, %v1574
    %v1578 = vperm.slane %v1495, 0
    %v1580 = vadd.f32 %v1576, %v1578
    %v1581 = vld [vmem:[%s105] sm:$0xff]
    %v1582 = vld [vmem:[%s105 + $0x8] sm:$0xff]
    %v1583 = vld [vmem:[%s107] sm:$0xff]
    %v1584 = vld [vmem:[%s107 + $0x8] sm:$0xff]
    %v1585 = vld [vmem:[%s107 + $0x10] sm:$0xff]
    %v1586 = vld [vmem:[#allocation19] sm:$0x1]
    %v1587 = vld [vmem:[%s111] sm:$0xff]
    %v1588 = vld [vmem:[%s111 + $0x8] sm:$0xff]
    %v1589 = vld [vmem:[%s111 + $0x10] sm:$0xff]
    %v1590 = vld [vmem:[%s111 + $0x18] sm:$0xff]
    %v1591 = vld [vmem:[%s111 + $0x20] sm:$0xff]
    %v1592 = vld [vmem:[%s111 + $0x28] sm:$0xff]
    %v1593 = vld [vmem:[%s111 + $0x30] sm:$0xff]
    %v1594 = vld [vmem:[%s111 + $0x38] sm:$0xff]
    %v1595 = vld [vmem:[#allocation20] sm:$0x1]
    %v1596 = vld [vmem:[%s115] sm:$0xff]
    %v1597 = vld [vmem:[%s115 + $0x8] sm:$0xff]
    %v1598 = vld [vmem:[%s117] sm:$0xff]
    %v1599 = vld [vmem:[%s117 + $0x8] sm:$0xff]
    %v1600 = vld [vmem:[%s117 + $0x10] sm:$0xff]
    %v1601 = vld [vmem:[#allocation22] sm:$0x1]
    %v1602 = vld [vmem:[#allocation23] sm:$0x1]
    %v1603 = vld [vmem:[#allocation25] sm:$0x1]
    %v1604 = vld [vmem:[%s125] sm:$0xff]
    %v1605 = vld [vmem:[%s125 + $0x8] sm:$0xff]
    %v1606 = vld [vmem:[%s127] sm:$0xf]
    %1607 = vrot.lane.b32.xlu0 %v878, 80
    %v1608 = vpop.permute.xlu0 %1607
    %vm1609 = vcmask 195584
    %v1610 = vsel %vm1609, %v1608, 0
    %1612 = vmatpush.msra.mxu0 0.0
    %1613 = vmatpush.msra.mxu0 0.0
    %1614 = vmatpush.msra.mxu0 0.0
    %1615 = vmatpush.msra.mxu0 0.0
    %1616 = vmatpush.msra.mxu0 0.0
    %1617 = vmatpush.msra.mxu0 0.0
    %1618 = vmatpush.msra.mxu0 0.0
    %1619 = vmatpush.msra.mxu0 0.0
    %1620 = vmatpush.msra.mxu0 0.0
    %1621 = vmatpush.msra.mxu0 0.0
    %1622 = vmatpush.msra.mxu0 0.0
    %1623 = vmatpush.msra.mxu0 0.0
    %1624 = vmatpush.msra.mxu0 0.0
    %1625 = vmatpush.msra.mxu0 %v1585
    %1626 = vmatpush.msra.mxu0 %v1584
    %1627 = vmatpush.msra.mxu0 %v1583
    %1628 = vmatmul.f32.gmra.mxu0 %v1610
    %v1629 = vpop.f32.mrf.mxu0
    %v1630 = vadd.f32 0.0, %v1629
    %1631 = vdwg.mxu0
    %v1633 = vsel %vm1499, %v1580, 0
    %1635 = vmatpush.msra.mxu0 0.0
    %1636 = vmatpush.msra.mxu0 0.0
    %1637 = vmatpush.msra.mxu0 0.0
    %1638 = vmatpush.msra.mxu0 0.0
    %1639 = vmatpush.msra.mxu0 0.0
    %1640 = vmatpush.msra.mxu0 0.0
    %1641 = vmatpush.msra.mxu0 0.0
    %1642 = vmatpush.msra.mxu0 0.0
    %1643 = vmatpush.msra.mxu0 0.0
    %1644 = vmatpush.msra.mxu0 0.0
    %1645 = vmatpush.msra.mxu0 0.0
    %1646 = vmatpush.msra.mxu0 0.0
    %1647 = vmatpush.msra.mxu0 0.0
    %1648 = vmatpush.msra.mxu0 0.0
    %1649 = vmatpush.msra.mxu0 %v1582
    %1650 = vmatpush.msra.mxu0 %v1581
    %1651 = vmatmul.f32.gmra.mxu0 %v1633
    %v1652 = vpop.f32.mrf.mxu0
    %v1653 = vadd.f32 %v1630, %v1652
    %1654 = vdwg.mxu0
    %v1656 = vperm.slane %v1586, 0
    %v1658 = vadd.f32 %v1653, %v1656
    %v1659 = vmax.f32 %v1658, 0.0
    %v1661 = vperm.slane %v1595, 0
    %vm1663 = vcmask 523264
    %v1665 = vsel %vm1663, %v1659, 0
    %1667 = vmatpush.msra.mxu0 0.0
    %1668 = vmatpush.msra.mxu0 0.0
    %1669 = vmatpush.msra.mxu0 0.0
    %1670 = vmatpush.msra.mxu0 0.0
    %1671 = vmatpush.msra.mxu0 0.0
    %1672 = vmatpush.msra.mxu0 0.0
    %1673 = vmatpush.msra.mxu0 0.0
    %1674 = vmatpush.msra.mxu0 0.0
    %1675 = vmatpush.msra.mxu0 %v1594
    %1676 = vmatpush.msra.mxu0 %v1593
    %1677 = vmatpush.msra.mxu0 %v1592
    %1678 = vmatpush.msra.mxu0 %v1591
    %1679 = vmatpush.msra.mxu0 %v1590
    %1680 = vmatpush.msra.mxu0 %v1589
    %1681 = vmatpush.msra.mxu0 %v1588
    %1682 = vmatpush.msra.mxu0 %v1587
    %1683 = vmatmul.f32.gmra.mxu0 %v1665
    %v1684 = vpop.f32.mrf.mxu0
    %v1685 = vadd.f32 %v1661, %v1684
    %1686 = vdwg.mxu0
    %1687 = vmatpush.msra.mxu0 0.0
    %1688 = vmatpush.msra.mxu0 0.0
    %1689 = vmatpush.msra.mxu0 0.0
    %1690 = vmatpush.msra.mxu0 0.0
    %1691 = vmatpush.msra.mxu0 0.0
    %1692 = vmatpush.msra.mxu0 0.0
    %1693 = vmatpush.msra.mxu0 0.0
    %1694 = vmatpush.msra.mxu0 0.0
    %1695 = vmatpush.msra.mxu0 0.0
    %1696 = vmatpush.msra.mxu0 0.0
    %1697 = vmatpush.msra.mxu0 0.0
    %1698 = vmatpush.msra.mxu0 0.0
    %1699 = vmatpush.msra.mxu0 0.0
    %1700 = vmatpush.msra.mxu0 0.0
    %1701 = vmatpush.msra.mxu0 %v1597
    %1702 = vmatpush.msra.mxu0 %v1596
    %1703 = vmatmul.f32.gmra.mxu0 %v1633
    %v1704 = vpop.f32.mrf.mxu0
    %v1705 = vadd.f32 0.0, %v1704
    %1706 = vdwg.mxu0
    %v1707 = vadd.f32 %v1685, %v1705
    %1708 = vmatpush.msra.mxu0 0.0
    %1709 = vmatpush.msra.mxu0 0.0
    %1710 = vmatpush.msra.mxu0 0.0
    %1711 = vmatpush.msra.mxu0 0.0
    %1712 = vmatpush.msra.mxu0 0.0
    %1713 = vmatpush.msra.mxu0 0.0
    %1714 = vmatpush.msra.mxu0 0.0
    %1715 = vmatpush.msra.mxu0 0.0
    %1716 = vmatpush.msra.mxu0 0.0
    %1717 = vmatpush.msra.mxu0 0.0
    %1718 = vmatpush.msra.mxu0 0.0
    %1719 = vmatpush.msra.mxu0 0.0
    %1720 = vmatpush.msra.mxu0 0.0
    %1721 = vmatpush.msra.mxu0 %v1600
    %1722 = vmatpush.msra.mxu0 %v1599
    %1723 = vmatpush.msra.mxu0 %v1598
    %1724 = vmatmul.f32.gmra.mxu0 %v1610
    %v1725 = vpop.f32.mrf.mxu0
    %v1726 = vadd.f32 0.0, %v1725
    %1727 = vdwg.mxu0
    %v1728 = vadd.f32 %v1707, %v1726
    %v1730 = vperm.slane %v1601, 0
    %v1732 = vadd.f32 %v1728, %v1730
    %v1734 = vsel %vm1499, %v1732, 0
    %1736 = vmatpush.msra.mxu0 0.0
    %1737 = vmatpush.msra.mxu0 0.0
    %1738 = vmatpush.msra.mxu0 0.0
    %1739 = vmatpush.msra.mxu0 0.0
    %1740 = vmatpush.msra.mxu0 0.0
    %1741 = vmatpush.msra.mxu0 0.0
    %1742 = vmatpush.msra.mxu0 0.0
    %1743 = vmatpush.msra.mxu0 0.0
    %1744 = vmatpush.msra.mxu0 0.0
    %1745 = vmatpush.msra.mxu0 0.0
    %1746 = vmatpush.msra.mxu0 0.0
    %1747 = vmatpush.msra.mxu0 0.0
    %1748 = vmatpush.msra.mxu0 0.0
    %1749 = vmatpush.msra.mxu0 0.0
    %1750 = vmatpush.msra.mxu0 %v1605
    %1751 = vmatpush.msra.mxu0 %v1604
    %1752 = vmatmul.f32.gmra.mxu0 %v1734
    %v1753 = vpop.f32.mrf.mxu0
    %v1754 = vadd.f32 0.0, %v1753
    %1755 = vdwg.mxu0
    %v1757 = vsel %vm913, %v1754, 0
    %v1760 = vsel %vm598, %v1606, 0
    %1762 = vmatpush.msra.mxu0 0.0
    %1763 = vmatpush.msra.mxu0 0.0
    %1764 = vmatpush.msra.mxu0 0.0
    %1765 = vmatpush.msra.mxu0 0.0
    %1766 = vmatpush.msra.mxu0 0.0
    %1767 = vmatpush.msra.mxu0 0.0
    %1768 = vmatpush.msra.mxu0 0.0
    %1769 = vmatpush.msra.mxu0 0.0
    %1770 = vmatpush.msra.mxu0 0.0
    %1771 = vmatpush.msra.mxu0 0.0
    %1772 = vmatpush.msra.mxu0 0.0
    %1773 = vmatpush.msra.mxu0 0.0
    %1774 = vmatpush.msra.mxu0 0.0
    %1775 = vmatpush.msra.mxu0 0.0
    %1776 = vmatpush.msra.mxu0 0.0
    %1777 = vmatpush.msra.mxu0 %v1760
    %1778 = vmatmul.f32.gmra.mxu0 %v1757
    %v1779 = vpop.f32.mrf.mxu0
    %v1780 = vadd.f32 0.0, %v1779
    %1781 = vdwg.mxu0
    %v1782 = vsub.f32 %v1732, %v1780
    %v1783 = vmul.f32 %v1782, %v1782
    %v1785 = vsel %vm1499, %v1783, 0
    %1787 = vmatpush.msra.mxu0 0.0
    %1788 = vmatpush.msra.mxu0 0.0
    %1789 = vmatpush.msra.mxu0 0.0
    %1790 = vmatpush.msra.mxu0 0.0
    %1791 = vmatpush.msra.mxu0 0.0
    %1792 = vmatpush.msra.mxu0 0.0
    %1793 = vmatpush.msra.mxu0 0.0
    %1794 = vmatpush.msra.mxu0 0.0
    %1795 = vmatpush.msra.mxu0 0.0
    %1796 = vmatpush.msra.mxu0 0.0
    %1797 = vmatpush.msra.mxu0 0.0
    %1798 = vmatpush.msra.mxu0 0.0
    %1799 = vmatpush.msra.mxu0 0.0
    %1800 = vmatpush.msra.mxu0 0.0
    %1801 = vmatpush.msra.mxu0 %v1605
    %1802 = vmatpush.msra.mxu0 %v1604
    %1803 = vmatmul.f32.gmra.mxu0 %v1785
    %v1804 = vpop.f32.mrf.mxu0
    %v1805 = vadd.f32 1e-05, %v1804
    %1806 = vdwg.mxu0
    %v1807 = vrsqrt.pop %v1805
    %v1808 = vmul.f32 %v1807, %v1805
    %v1809 = vmul.f32 %v1808, %v1807
    %v1810 = vmul.f32 0.5, %v1809
    %v1811 = vsub.f32 1.5, %v1810
    %v1812 = vmul.f32 %v1807, %v1811
    %vm1813 = vweird.f32 %v1805
    %vm1814 = vweird.f32 %v1807
    %vm1815 = vmor %vm1813, %vm1814
    %v1816 = vsel %vm1815, %v1807, %v1812
    %v1818 = vsel %vm913, %v1816, 0
    %1820 = vmatpush.msra.mxu0 0.0
    %1821 = vmatpush.msra.mxu0 0.0
    %1822 = vmatpush.msra.mxu0 0.0
    %1823 = vmatpush.msra.mxu0 0.0
    %1824 = vmatpush.msra.mxu0 0.0
    %1825 = vmatpush.msra.mxu0 0.0
    %1826 = vmatpush.msra.mxu0 0.0
    %1827 = vmatpush.msra.mxu0 0.0
    %1828 = vmatpush.msra.mxu0 0.0
    %1829 = vmatpush.msra.mxu0 0.0
    %1830 = vmatpush.msra.mxu0 0.0
    %1831 = vmatpush.msra.mxu0 0.0
    %1832 = vmatpush.msra.mxu0 0.0
    %1833 = vmatpush.msra.mxu0 0.0
    %1834 = vmatpush.msra.mxu0 0.0
    %1835 = vmatpush.msra.mxu0 %v1760
    %1836 = vmatmul.f32.gmra.mxu0 %v1818
    %v1837 = vpop.f32.mrf.mxu0
    %v1838 = vadd.f32 0.0, %v1837
    %1839 = vdwg.mxu0
    %v1840 = vmul.f32 %v1782, %v1838
    %v1842 = vperm.slane %v1602, 0
    %v1844 = vmul.f32 %v1840, %v1842
    %v1846 = vperm.slane %v1603, 0
    %v1848 = vadd.f32 %v1844, %v1846
    %v1849 = vld [vmem:[%s129] sm:$0xff]
    %v1850 = vld [vmem:[%s129 + $0x8] sm:$0xff]
    %v1851 = vld [vmem:[%s129 + $0x10] sm:$0xff]
    %v1852 = vld [vmem:[%s129 + $0x18] sm:$0xff]
    %v1853 = vld [vmem:[#allocation26] sm:$0x1]
    %1854 = vmatpush.msra.mxu0 0.0
    %1855 = vmatpush.msra.mxu0 0.0
    %1856 = vmatpush.msra.mxu0 0.0
    %1857 = vmatpush.msra.mxu0 0.0
    %1858 = vmatpush.msra.mxu0 0.0
    %1859 = vmatpush.msra.mxu0 0.0
    %1860 = vmatpush.msra.mxu0 0.0
    %1861 = vmatpush.msra.mxu0 0.0
    %1862 = vmatpush.msra.mxu0 0.0
    %1863 = vmatpush.msra.mxu0 0.0
    %1864 = vmatpush.msra.mxu0 0.0
    %1865 = vmatpush.msra.mxu0 0.0
    %1866 = vmatpush.msra.mxu0 %v1852
    %1867 = vmatpush.msra.mxu0 %v1851
    %1868 = vmatpush.msra.mxu0 %v1850
    %1869 = vmatpush.msra.mxu0 %v1849
    %1870 = vmatmul.f32.gmra.mxu0 %v1096
    %v1871 = vpop.f32.mrf.mxu0
    %v1872 = vadd.f32 0.0, %v1871
    %1873 = vdwg.mxu0
    %v1874 = vadd.f32 %v1848, %v1872
    %v1876 = vperm.slane %v1853, 0
    %v1878 = vadd.f32 %v1874, %v1876
    %v1879 = vadd.f32 %v887, 1e-10
    %v1880 = vrcp.pop %v1879
    %v1882 = vperm.slane %v888, 0
    %v1884 = vsub.f32 %v1878, %v1882
    %v1886 = vperm.slane %v1880, 0
    %v1888 = vmul.f32 %v1884, %v1886
    %v1889 = vrsqrt.pop %v963
    %v1890 = vmul.f32 %v1889, %v963
    %v1891 = vmul.f32 %v1890, %v1889
    %v1892 = vmul.f32 0.5, %v1891
    %v1893 = vsub.f32 1.5, %v1892
    %v1894 = vmul.f32 %v1889, %v1893
    %v1895 = vmul.f32 %v963, %v1894
    %vm1896 = vcmp.eq.f32.partialorder %v963, inf
    %v1897 = vsel %vm1896, %v963, %v1895
    %vm1898 = vcmp.eq.f32.partialorder %v963, 0.0
    %v1899 = vand.u32 %v963, 2147483648
    %v1900 = vsel %vm1898, %v1899, %v1897
    %v1902 = vsel %vm913, %v1900, 0
    %v1905 = vsel %vm598, %v884, 0
    %1907 = vmatpush.msra.mxu0 0.0
    %1908 = vmatpush.msra.mxu0 0.0
    %1909 = vmatpush.msra.mxu0 0.0
    %1910 = vmatpush.msra.mxu0 0.0
    %1911 = vmatpush.msra.mxu0 0.0
    %1912 = vmatpush.msra.mxu0 0.0
    %1913 = vmatpush.msra.mxu0 0.0
    %1914 = vmatpush.msra.mxu0 0.0
    %1915 = vmatpush.msra.mxu0 0.0
    %1916 = vmatpush.msra.mxu0 0.0
    %1917 = vmatpush.msra.mxu0 0.0
    %1918 = vmatpush.msra.mxu0 0.0
    %1919 = vmatpush.msra.mxu0 0.0
    %1920 = vmatpush.msra.mxu0 0.0
    %1921 = vmatpush.msra.mxu0 0.0
    %1922 = vmatpush.msra.mxu0 %v1905
    %1923 = vmatmul.f32.gmra.mxu0 %v1902
    %v1924 = vpop.f32.mrf.mxu0
    %v1925 = vadd.f32 0.0, %v1924
    %1926 = vdwg.mxu0
    %v1927 = vmul.f32 %v1888, %v1925
    %1928 = vmatpush.msra.mxu0 0.0
    %1929 = vmatpush.msra.mxu0 0.0
    %1930 = vmatpush.msra.mxu0 0.0
    %1931 = vmatpush.msra.mxu0 0.0
    %1932 = vmatpush.msra.mxu0 0.0
    %1933 = vmatpush.msra.mxu0 0.0
    %1934 = vmatpush.msra.mxu0 0.0
    %1935 = vmatpush.msra.mxu0 0.0
    %1936 = vmatpush.msra.mxu0 0.0
    %1937 = vmatpush.msra.mxu0 0.0
    %1938 = vmatpush.msra.mxu0 0.0
    %1939 = vmatpush.msra.mxu0 0.0
    %1940 = vmatpush.msra.mxu0 0.0
    %1941 = vmatpush.msra.mxu0 0.0
    %1942 = vmatpush.msra.mxu0 0.0
    %1943 = vmatpush.msra.mxu0 %v1905
    %1944 = vmatmul.f32.gmra.mxu0 %v915
    %v1945 = vpop.f32.mrf.mxu0
    %v1946 = vadd.f32 0.0, %v1945
    %1947 = vdwg.mxu0
    %v1948 = vadd.f32 %v1927, %v1946
    %1949 = vst.msk [vmem:[#allocation28] sm:$0x3] %vm1448, %v1948
    // Predicated region
    $region330: #{tpu_custom_call.1} parent=1 // pred_check
      _
    $region331: #{tpu_custom_call.1} parent=1 // pred_check_branch
      %1951 = sbr.rel (0) target = $region333
    $region332: #{tpu_custom_call.1} parent=1 // pred_region
      %1953 = vsyncadd [#allocation4], 0
      %s1955 = sshll.u32 [#allocation28], 4
      %s1956 = int_to_ptr.vmem [resolvable:$true] %s1955
      %s1957 = sshll.u32 %s133, 4
      %s1958 = int_to_ptr.hbm [resolvable:$true] %s1957
      %1960 = dma.vmem_to_hbm [thread:$0]  %s1956, 32, %s1958, [#allocation4]
    $region333: #{tpu_custom_call.1} parent=1 // pred_fallthru
      _
    // Predicated region
    $region334: #{tpu_custom_call.1} parent=1 // pred_check
      _
    $region335: #{tpu_custom_call.1} parent=1 // pred_check_branch
      %1962 = sbr.rel (0) target = $region337
    $region336: #{tpu_custom_call.1} parent=1 // pred_region
      %1964 = dma.done [#allocation4], 32
    $region337: #{tpu_custom_call.1} parent=1 // pred_fallthru
      _
    %1965 = vsyncpa [#allocation3], 1
    %1966 = vsyncpa [#allocation6], 1
    %1967 = vsyncpa [#allocation9], 1
    %1968 = vsyncpa [#allocation12], 1
    %1969 = vsyncpa [#allocation15], 1
    %1970 = vsyncpa [#allocation18], 1
    %1971 = vsyncpa [#allocation21], 1
    %1972 = vsyncpa [#allocation24], 1
    %1973 = vsyncpa [#allocation27], 1
    %1974 = vsyncpa [#allocation4], 1

</llo_original>
